<compile_context>
chip_gen: v7x
topology: tpu7x:2x2x1
jax: 0.10.0
libtpu: 0.0.40
codegen_flags: <defaults>
</compile_context>

<pallas_src>
import functools

import jax
import jax.numpy as jnp
from jax import lax
from jax.experimental import pallas as pl
from jax.experimental.pallas import tpu as pltpu


def _round_up(x, m):
    return (x + m - 1) // m * m


def bow_snli_kernel(p_tok_ref, h_tok_ref, ttab_ref, w1_ref, b12_ref, w2_ref,
                    wo_ref, out_ref, *, num_classes):
    """Fused: bag-of-words counts -> count matmul -> MLP -> masked softmax.

    p_tok_ref/h_tok_ref : (B, S_p)/(B, S_h) int32 token ids (batch on sublanes).
    ttab_ref            : (Vp, E)  precomputed ReLU(emb @ W_t + b_t), zero-padded.
    w1_ref              : (2E, Hp); b12_ref: (2, Hp) [row 0 = b_1, row 1 = b_2].
    w2_ref              : (Hp, Hp); wo_ref: (Hp, Cp).
    out_ref             : (B, Cp) softmax probs (padded class lanes are exactly 0).
    """
    b_dim, seq_p = p_tok_ref.shape
    seq_h = h_tok_ref.shape[1]
    vp, _emb_dim = ttab_ref.shape

    # One hoisted (B, Vp) lane-iota reused for both sentences (JAX does not CSE
    # broadcast_in_dim, so build it exactly once).
    vocab_iota = lax.broadcasted_iota(jnp.int32, (b_dim, vp), 1)

    def counts_of(tok):  # tok: (B, S) int32 -> (B, Vp) f32 occurrence counts
        acc = jnp.zeros((b_dim, vp), jnp.float32)
        for s in range(tok.shape[1]):  # static unroll; S is 6..8
            acc = acc + (tok[:, s:s + 1] == vocab_iota).astype(jnp.float32)
        return acc

    # Fuse the premise / hypothesis paths: one (2B, Vp) LHS so t_tab streams
    # through the MXU only once (the V-proportional work dominates).
    counts = jnp.concatenate(
        [counts_of(p_tok_ref[...]), counts_of(h_tok_ref[...])], axis=0)
    means = jnp.dot(counts.astype(ttab_ref.dtype), ttab_ref[...],
                    preferred_element_type=jnp.float32)            # (2B, E)

    # Apply the 1/seq mean scale on the small (2B, E) output, per half.
    row = lax.broadcasted_iota(jnp.int32, (2 * b_dim, 1), 0)
    means = means * jnp.where(row < b_dim,
                              jnp.float32(1.0 / seq_p),
                              jnp.float32(1.0 / seq_h))

    # torch.cat((p, h), 1): lane-concat of the two (B, E) halves -> (B, 2E=128),
    # exactly one lane tile feeding the single unsplit W_1 matmul.
    ph = jnp.concatenate([means[:b_dim, :], means[b_dim:, :]], axis=1)

    b12 = b12_ref[...]
    b1 = b12[0:1, :]
    b2 = b12[1:2, :]

    # (dropout p=0.35 == identity in eval mode)
    x = jnp.dot(ph.astype(w1_ref.dtype), w1_ref[...],
                preferred_element_type=jnp.float32) + b1
    x = jnp.maximum(x, 0.0)
    x = jnp.dot(x.astype(w2_ref.dtype), w2_ref[...],
                preferred_element_type=jnp.float32) + b2
    x = jnp.maximum(x, 0.0)
    logits = jnp.dot(x.astype(wo_ref.dtype), wo_ref[...],
                     preferred_element_type=jnp.float32)           # (B, Cp)

    # Masked softmax over the true classes; padded lanes get -1e30 -> exp == 0.
    cp = logits.shape[1]
    lane = lax.broadcasted_iota(jnp.int32, (b_dim, cp), 1)
    logits = jnp.where(lane < num_classes, logits, jnp.float32(-1e30))
    m = jnp.max(logits, axis=1, keepdims=True)
    e = jnp.exp(logits - m)
    denom = jnp.sum(e, axis=1, keepdims=True)
    # Exact division: only B denominators, so the exact path is essentially
    # free and keeps row sums at 1 to f32 precision.
    out_ref[...] = e / denom


def prepare_params(params, lane=128, weights_dtype=jnp.float32):
    """One-time weight prep (host/XLA, outside the kernel):
      * precompute T = ReLU(emb @ W_t + b_t) so emb/W_t/b_t never hit the kernel,
      * zero-pad vocab / hidden / class dims to lane multiples (dense MXU tiles,
        lane-dense output store),
      * pack b_1/b_2 into one (2, Hp) operand to cut tiny-DMA prolog count.
    weights_dtype=jnp.bfloat16 halves weight DMA/VMEM on v6e/v7x (MXU-native);
    accumulation stays f32 via preferred_element_type in the kernel.
    """
    V, E = params["emb"].shape
    H = params["w_1"].shape[1]
    C = params["w_out"].shape[1]
    Vp = _round_up(V, lane)
    Hp = _round_up(H, lane)
    Cp = _round_up(C, lane)

    def pad2(a, rows, cols):
        return jnp.pad(a, ((0, rows - a.shape[0]), (0, cols - a.shape[1])))

    t_tab = jnp.maximum(params["emb"] @ params["w_t"] + params["b_t"], 0.0)

    return {
        "t_tab": pad2(t_tab, Vp, E).astype(weights_dtype),
        "w_1":   pad2(params["w_1"], 2 * E, Hp).astype(weights_dtype),
        "b_12":  jnp.concatenate([pad2(params["b_1"], 1, Hp),
                                  pad2(params["b_2"], 1, Hp)],
                                 axis=0).astype(jnp.float32),
        "w_2":   pad2(params["w_2"], Hp, Hp).astype(weights_dtype),
        "w_out": pad2(params["w_out"], Hp, Cp).astype(weights_dtype),
        "num_classes": C,
    }


def bow_snli_forward(premise, hypothesis, prepped):
    """premise/hypothesis: int32 (S, B) token ids. Returns softmax probs (B, C)."""
    B = premise.shape[1]
    C = prepped["num_classes"]
    Vp, E = prepped["t_tab"].shape
    Hp = prepped["w_2"].shape[0]
    Cp = prepped["w_out"].shape[1]

    # Batch on sublanes / sequence on lanes inside the kernel (one tiny XLA
    # transpose of the int32 id matrices; avoids per-step in-kernel relayouts).
    operands = (jnp.transpose(premise).astype(jnp.int32),
                jnp.transpose(hypothesis).astype(jnp.int32),
                prepped["t_tab"], prepped["w_1"], prepped["b_12"],
                prepped["w_2"], prepped["w_out"])

    in_bytes = int(sum(int(x.size) * x.dtype.itemsize for x in operands))
    out_bytes = B * Cp * 4
    # Resident intermediates: counts (2B,Vp), means (2B,E), ph (B,2E),
    # two (B,Hp) activations, (B,Cp) logits/probs -- all f32.
    interm_bytes = 4 * (2 * B * Vp + 2 * B * E + 2 * B * E
                        + 2 * B * Hp + 2 * B * Cp)
    # Actual footprint + headroom, clamped under the smallest physical VMEM
    # (v7x: 64 MiB).  At realistic SNLI vocab, tile V with an "arbitrary" grid
    # reduction axis instead of raising this limit.
    footprint = in_bytes + out_bytes + interm_bytes
    vmem_bytes = int(min(60 << 20, max(16 << 20, footprint + footprint // 4 + (4 << 20))))

    flops = 2 * (2 * B * Vp * E + B * (2 * E) * Hp + B * Hp * Hp + B * Hp * Cp)

    vmem = pl.BlockSpec(memory_space=pltpu.MemorySpace.VMEM)
    out_padded = pl.pallas_call(
        functools.partial(bow_snli_kernel, num_classes=C),
        out_shape=jax.ShapeDtypeStruct((B, Cp), jnp.float32),
        in_specs=[vmem] * len(operands),
        out_specs=vmem,
        compiler_params=pltpu.CompilerParams(vmem_limit_bytes=vmem_bytes),
        cost_estimate=pl.CostEstimate(
            flops=flops,
            transcendentals=B * Cp,
            bytes_accessed=in_bytes + out_bytes),
    )(*operands)
    return out_padded[:, :C]


def reference_forward(premise, hypothesis, params):
    """Pure-JAX reference of the same math (eval-mode dropout), unpadded weights."""
    emb = params["emb"]

    def enc(tok):
        x = emb[tok]                                              # (S, B, E)
        y = jnp.maximum(x @ params["w_t"] + params["b_t"], 0.0)   # (S, B, E)
        return jnp.mean(y, axis=0)                                # (B, E)

    x = jnp.concatenate([enc(premise), enc(hypothesis)], axis=1)
    x = jnp.maximum(x @ params["w_1"] + params["b_1"], 0.0)
    x = jnp.maximum(x @ params["w_2"] + params["b_2"], 0.0)
    logits = x @ params["w_out"]
    return jax.nn.softmax(logits, axis=1)


def make_params(key, vocab_size, emb_dim, hidden, num_classes):
    ks = jax.random.split(key, 8)
    scale = 0.1
    return {
        "emb":   scale * jax.random.normal(ks[0], (vocab_size, emb_dim), jnp.float32),
        "w_t":   scale * jax.random.normal(ks[1], (emb_dim, emb_dim), jnp.float32),
        "b_t":   scale * jax.random.normal(ks[2], (1, emb_dim), jnp.float32),
        "w_1":   scale * jax.random.normal(ks[3], (2 * emb_dim, hidden), jnp.float32),
        "b_1":   scale * jax.random.normal(ks[4], (1, hidden), jnp.float32),
        "w_2":   scale * jax.random.normal(ks[5], (hidden, hidden), jnp.float32),
        "b_2":   scale * jax.random.normal(ks[6], (1, hidden), jnp.float32),
        "w_out": scale * jax.random.normal(ks[7], (hidden, num_classes), jnp.float32),
    }


if __name__ == "__main__":
    VOCAB = 100       # num_embeddings (TEXT.vocab.vectors.size(0))
    EMB = 64          # embedding_dim  (TEXT.vocab.vectors.size(1))
    HIDDEN = 300      # hardwired in the module
    NUM_CLASSES = 3   # len(LABEL.vocab.itos) for SNLI
    SEQ_P, SEQ_H, BATCH = 8, 6, 4

    key = jax.random.PRNGKey(0)
    k_par, k_p, k_h = jax.random.split(key, 3)

    params = make_params(k_par, VOCAB, EMB, HIDDEN, NUM_CLASSES)
    prepped = prepare_params(params)   # f32 weights; pass jnp.bfloat16 on v6e/v7x

    premise = jax.random.randint(k_p, (SEQ_P, BATCH), 0, VOCAB, dtype=jnp.int32)
    hypothesis = jax.random.randint(k_h, (SEQ_H, BATCH), 0, VOCAB, dtype=jnp.int32)

    out = bow_snli_forward(premise, hypothesis, prepped)
    out = jax.block_until_ready(out)

    ref = reference_forward(premise, hypothesis, params)
    assert out.shape == (BATCH, NUM_CLASSES)
    assert jnp.allclose(out, ref, rtol=1e-3, atol=1e-3), "mismatch vs reference"
    assert jnp.allclose(jnp.sum(out, axis=1), 1.0, atol=1e-4), "softmax rows must sum to ~1"

    print("KERNEL_OK")
</pallas_src>

<mosaic_0001>
module attributes {stable_mosaic.version = 11 : i64} {
  func.func @bow_snli_kernel(%arg0: memref<4x8xi32, #tpu.memory_space<vmem>>, %arg1: memref<4x6xi32, #tpu.memory_space<vmem>>, %arg2: memref<128x64xf32, #tpu.memory_space<vmem>>, %arg3: memref<128x384xf32, #tpu.memory_space<vmem>>, %arg4: memref<2x384xf32, #tpu.memory_space<vmem>>, %arg5: memref<384x384xf32, #tpu.memory_space<vmem>>, %arg6: memref<384x128xf32, #tpu.memory_space<vmem>>, %arg7: memref<4x128xf32, #tpu.memory_space<vmem>>) attributes {dimension_semantics = [], scalar_prefetch = 0 : i64, scratch_operands = 0 : i64, tpu.core_type = #tpu.core_type<tc>} {
    %0 = tpu.iota {dimensions = array<i32: 1>} : vector<4x128xi32>
    %c0 = arith.constant 0 : index
    %c0_0 = arith.constant 0 : index
    %1 = vector.load %arg0[%c0, %c0_0] : memref<4x8xi32, #tpu.memory_space<vmem>>, vector<4x8xi32>
    %cst = arith.constant 0.000000e+00 : f32
    %2 = vector.broadcast %cst : f32 to vector<4x128xf32>
    %3 = vector.extract_strided_slice %1 {offsets = [0, 0], sizes = [4, 1], strides = [1, 1]} : vector<4x8xi32> to vector<4x1xi32>
    %4 = vector.broadcast %3 : vector<4x1xi32> to vector<4x128xi32>
    %5 = arith.cmpi eq, %4, %0 : vector<4x128xi32>
    %6 = arith.extui %5 : vector<4x128xi1> to vector<4x128xi32>
    %7 = arith.sitofp %6 : vector<4x128xi32> to vector<4x128xf32>
    %8 = arith.addf %2, %7 : vector<4x128xf32>
    %9 = vector.extract_strided_slice %1 {offsets = [0, 1], sizes = [4, 1], strides = [1, 1]} : vector<4x8xi32> to vector<4x1xi32>
    %10 = vector.broadcast %9 : vector<4x1xi32> to vector<4x128xi32>
    %11 = arith.cmpi eq, %10, %0 : vector<4x128xi32>
    %12 = arith.extui %11 : vector<4x128xi1> to vector<4x128xi32>
    %13 = arith.sitofp %12 : vector<4x128xi32> to vector<4x128xf32>
    %14 = arith.addf %8, %13 : vector<4x128xf32>
    %15 = vector.extract_strided_slice %1 {offsets = [0, 2], sizes = [4, 1], strides = [1, 1]} : vector<4x8xi32> to vector<4x1xi32>
    %16 = vector.broadcast %15 : vector<4x1xi32> to vector<4x128xi32>
    %17 = arith.cmpi eq, %16, %0 : vector<4x128xi32>
    %18 = arith.extui %17 : vector<4x128xi1> to vector<4x128xi32>
    %19 = arith.sitofp %18 : vector<4x128xi32> to vector<4x128xf32>
    %20 = arith.addf %14, %19 : vector<4x128xf32>
    %21 = vector.extract_strided_slice %1 {offsets = [0, 3], sizes = [4, 1], strides = [1, 1]} : vector<4x8xi32> to vector<4x1xi32>
    %22 = vector.broadcast %21 : vector<4x1xi32> to vector<4x128xi32>
    %23 = arith.cmpi eq, %22, %0 : vector<4x128xi32>
    %24 = arith.extui %23 : vector<4x128xi1> to vector<4x128xi32>
    %25 = arith.sitofp %24 : vector<4x128xi32> to vector<4x128xf32>
    %26 = arith.addf %20, %25 : vector<4x128xf32>
    %27 = vector.extract_strided_slice %1 {offsets = [0, 4], sizes = [4, 1], strides = [1, 1]} : vector<4x8xi32> to vector<4x1xi32>
    %28 = vector.broadcast %27 : vector<4x1xi32> to vector<4x128xi32>
    %29 = arith.cmpi eq, %28, %0 : vector<4x128xi32>
    %30 = arith.extui %29 : vector<4x128xi1> to vector<4x128xi32>
    %31 = arith.sitofp %30 : vector<4x128xi32> to vector<4x128xf32>
    %32 = arith.addf %26, %31 : vector<4x128xf32>
    %33 = vector.extract_strided_slice %1 {offsets = [0, 5], sizes = [4, 1], strides = [1, 1]} : vector<4x8xi32> to vector<4x1xi32>
    %34 = vector.broadcast %33 : vector<4x1xi32> to vector<4x128xi32>
    %35 = arith.cmpi eq, %34, %0 : vector<4x128xi32>
    %36 = arith.extui %35 : vector<4x128xi1> to vector<4x128xi32>
    %37 = arith.sitofp %36 : vector<4x128xi32> to vector<4x128xf32>
    %38 = arith.addf %32, %37 : vector<4x128xf32>
    %39 = vector.extract_strided_slice %1 {offsets = [0, 6], sizes = [4, 1], strides = [1, 1]} : vector<4x8xi32> to vector<4x1xi32>
    %40 = vector.broadcast %39 : vector<4x1xi32> to vector<4x128xi32>
    %41 = arith.cmpi eq, %40, %0 : vector<4x128xi32>
    %42 = arith.extui %41 : vector<4x128xi1> to vector<4x128xi32>
    %43 = arith.sitofp %42 : vector<4x128xi32> to vector<4x128xf32>
    %44 = arith.addf %38, %43 : vector<4x128xf32>
    %45 = vector.extract_strided_slice %1 {offsets = [0, 7], sizes = [4, 1], strides = [1, 1]} : vector<4x8xi32> to vector<4x1xi32>
    %46 = vector.broadcast %45 : vector<4x1xi32> to vector<4x128xi32>
    %47 = arith.cmpi eq, %46, %0 : vector<4x128xi32>
    %48 = arith.extui %47 : vector<4x128xi1> to vector<4x128xi32>
    %49 = arith.sitofp %48 : vector<4x128xi32> to vector<4x128xf32>
    %50 = arith.addf %44, %49 : vector<4x128xf32>
    %c0_1 = arith.constant 0 : index
    %c0_2 = arith.constant 0 : index
    %51 = vector.load %arg1[%c0_1, %c0_2] : memref<4x6xi32, #tpu.memory_space<vmem>>, vector<4x6xi32>
    %cst_3 = arith.constant 0.000000e+00 : f32
    %52 = vector.broadcast %cst_3 : f32 to vector<4x128xf32>
    %53 = vector.extract_strided_slice %51 {offsets = [0, 0], sizes = [4, 1], strides = [1, 1]} : vector<4x6xi32> to vector<4x1xi32>
    %54 = vector.broadcast %53 : vector<4x1xi32> to vector<4x128xi32>
    %55 = arith.cmpi eq, %54, %0 : vector<4x128xi32>
    %56 = arith.extui %55 : vector<4x128xi1> to vector<4x128xi32>
    %57 = arith.sitofp %56 : vector<4x128xi32> to vector<4x128xf32>
    %58 = arith.addf %52, %57 : vector<4x128xf32>
    %59 = vector.extract_strided_slice %51 {offsets = [0, 1], sizes = [4, 1], strides = [1, 1]} : vector<4x6xi32> to vector<4x1xi32>
    %60 = vector.broadcast %59 : vector<4x1xi32> to vector<4x128xi32>
    %61 = arith.cmpi eq, %60, %0 : vector<4x128xi32>
    %62 = arith.extui %61 : vector<4x128xi1> to vector<4x128xi32>
    %63 = arith.sitofp %62 : vector<4x128xi32> to vector<4x128xf32>
    %64 = arith.addf %58, %63 : vector<4x128xf32>
    %65 = vector.extract_strided_slice %51 {offsets = [0, 2], sizes = [4, 1], strides = [1, 1]} : vector<4x6xi32> to vector<4x1xi32>
    %66 = vector.broadcast %65 : vector<4x1xi32> to vector<4x128xi32>
    %67 = arith.cmpi eq, %66, %0 : vector<4x128xi32>
    %68 = arith.extui %67 : vector<4x128xi1> to vector<4x128xi32>
    %69 = arith.sitofp %68 : vector<4x128xi32> to vector<4x128xf32>
    %70 = arith.addf %64, %69 : vector<4x128xf32>
    %71 = vector.extract_strided_slice %51 {offsets = [0, 3], sizes = [4, 1], strides = [1, 1]} : vector<4x6xi32> to vector<4x1xi32>
    %72 = vector.broadcast %71 : vector<4x1xi32> to vector<4x128xi32>
    %73 = arith.cmpi eq, %72, %0 : vector<4x128xi32>
    %74 = arith.extui %73 : vector<4x128xi1> to vector<4x128xi32>
    %75 = arith.sitofp %74 : vector<4x128xi32> to vector<4x128xf32>
    %76 = arith.addf %70, %75 : vector<4x128xf32>
    %77 = vector.extract_strided_slice %51 {offsets = [0, 4], sizes = [4, 1], strides = [1, 1]} : vector<4x6xi32> to vector<4x1xi32>
    %78 = vector.broadcast %77 : vector<4x1xi32> to vector<4x128xi32>
    %79 = arith.cmpi eq, %78, %0 : vector<4x128xi32>
    %80 = arith.extui %79 : vector<4x128xi1> to vector<4x128xi32>
    %81 = arith.sitofp %80 : vector<4x128xi32> to vector<4x128xf32>
    %82 = arith.addf %76, %81 : vector<4x128xf32>
    %83 = vector.extract_strided_slice %51 {offsets = [0, 5], sizes = [4, 1], strides = [1, 1]} : vector<4x6xi32> to vector<4x1xi32>
    %84 = vector.broadcast %83 : vector<4x1xi32> to vector<4x128xi32>
    %85 = arith.cmpi eq, %84, %0 : vector<4x128xi32>
    %86 = arith.extui %85 : vector<4x128xi1> to vector<4x128xi32>
    %87 = arith.sitofp %86 : vector<4x128xi32> to vector<4x128xf32>
    %88 = arith.addf %82, %87 : vector<4x128xf32>
    %89 = tpu.concatenate %50, %88 in 0 : vector<4x128xf32>, vector<4x128xf32> -> vector<8x128xf32>
    %c0_4 = arith.constant 0 : index
    %c0_5 = arith.constant 0 : index
    %90 = vector.load %arg2[%c0_4, %c0_5] : memref<128x64xf32, #tpu.memory_space<vmem>>, vector<128x64xf32>
    %cst_6 = arith.constant dense<0.000000e+00> : vector<8x64xf32>
    %91 = tpu.matmul %89, %90, %cst_6 {dimension_numbers = #tpu.dot_dimension_numbers<[1], [0], [0], [1], [0, 0, 1, 1], [], []>} : vector<8x128xf32>, vector<128x64xf32>, vector<8x64xf32> -> vector<8x64xf32>
    %92 = tpu.iota {dimensions = array<i32: 0>} : vector<8x1xi32>
    %c4_i32 = arith.constant 4 : i32
    %93 = vector.broadcast %c4_i32 : i32 to vector<8x1xi32>
    %94 = arith.cmpi slt, %92, %93 : vector<8x1xi32>
    %cst_7 = arith.constant 1.250000e-01 : f32
    %cst_8 = arith.constant 0.166666672 : f32
    %95 = vector.broadcast %cst_7 : f32 to vector<8x1xf32>
    %96 = vector.broadcast %cst_8 : f32 to vector<8x1xf32>
    %97 = arith.select %94, %95, %96 : vector<8x1xi1>, vector<8x1xf32>
    %98 = vector.broadcast %97 : vector<8x1xf32> to vector<8x64xf32>
    %99 = arith.mulf %91, %98 : vector<8x64xf32>
    %100 = vector.extract_strided_slice %99 {offsets = [0, 0], sizes = [4, 64], strides = [1, 1]} : vector<8x64xf32> to vector<4x64xf32>
    %101 = vector.extract_strided_slice %99 {offsets = [4, 0], sizes = [4, 64], strides = [1, 1]} : vector<8x64xf32> to vector<4x64xf32>
    %102 = tpu.concatenate %100, %101 in 1 : vector<4x64xf32>, vector<4x64xf32> -> vector<4x128xf32>
    %c0_9 = arith.constant 0 : index
    %c0_10 = arith.constant 0 : index
    %103 = vector.load %arg4[%c0_9, %c0_10] : memref<2x384xf32, #tpu.memory_space<vmem>>, vector<2x384xf32>
    %104 = vector.extract_strided_slice %103 {offsets = [0, 0], sizes = [1, 384], strides = [1, 1]} : vector<2x384xf32> to vector<1x384xf32>
    %105 = vector.extract_strided_slice %103 {offsets = [1, 0], sizes = [1, 384], strides = [1, 1]} : vector<2x384xf32> to vector<1x384xf32>
    %c0_11 = arith.constant 0 : index
    %c0_12 = arith.constant 0 : index
    %106 = vector.load %arg3[%c0_11, %c0_12] : memref<128x384xf32, #tpu.memory_space<vmem>>, vector<128x384xf32>
    %cst_13 = arith.constant dense<0.000000e+00> : vector<4x384xf32>
    %107 = tpu.matmul %102, %106, %cst_13 {dimension_numbers = #tpu.dot_dimension_numbers<[1], [0], [0], [1], [0, 0, 1, 1], [], []>} : vector<4x128xf32>, vector<128x384xf32>, vector<4x384xf32> -> vector<4x384xf32>
    %108 = vector.broadcast %104 : vector<1x384xf32> to vector<4x384xf32>
    %109 = arith.addf %107, %108 : vector<4x384xf32>
    %cst_14 = arith.constant 0.000000e+00 : f32
    %110 = vector.broadcast %cst_14 : f32 to vector<4x384xf32>
    %111 = arith.maximumf %109, %110 : vector<4x384xf32>
    %c0_15 = arith.constant 0 : index
    %c0_16 = arith.constant 0 : index
    %112 = vector.load %arg5[%c0_15, %c0_16] : memref<384x384xf32, #tpu.memory_space<vmem>>, vector<384x384xf32>
    %cst_17 = arith.constant dense<0.000000e+00> : vector<4x384xf32>
    %113 = tpu.matmul %111, %112, %cst_17 {dimension_numbers = #tpu.dot_dimension_numbers<[1], [0], [0], [1], [0, 0, 1, 1], [], []>} : vector<4x384xf32>, vector<384x384xf32>, vector<4x384xf32> -> vector<4x384xf32>
    %114 = vector.broadcast %105 : vector<1x384xf32> to vector<4x384xf32>
    %115 = arith.addf %113, %114 : vector<4x384xf32>
    %cst_18 = arith.constant 0.000000e+00 : f32
    %116 = vector.broadcast %cst_18 : f32 to vector<4x384xf32>
    %117 = arith.maximumf %115, %116 : vector<4x384xf32>
    %c0_19 = arith.constant 0 : index
    %c0_20 = arith.constant 0 : index
    %118 = vector.load %arg6[%c0_19, %c0_20] : memref<384x128xf32, #tpu.memory_space<vmem>>, vector<384x128xf32>
    %cst_21 = arith.constant dense<0.000000e+00> : vector<4x128xf32>
    %119 = tpu.matmul %117, %118, %cst_21 {dimension_numbers = #tpu.dot_dimension_numbers<[1], [0], [0], [1], [0, 0, 1, 1], [], []>} : vector<4x384xf32>, vector<384x128xf32>, vector<4x128xf32> -> vector<4x128xf32>
    %120 = tpu.iota {dimensions = array<i32: 1>} : vector<4x128xi32>
    %c3_i32 = arith.constant 3 : i32
    %121 = vector.broadcast %c3_i32 : i32 to vector<4x128xi32>
    %122 = arith.cmpi slt, %120, %121 : vector<4x128xi32>
    %cst_22 = arith.constant -1.000000e+30 : f32
    %123 = vector.broadcast %cst_22 : f32 to vector<4x128xf32>
    %124 = arith.select %122, %119, %123 : vector<4x128xi1>, vector<4x128xf32>
    %cst_23 = arith.constant dense<0xFF800000> : vector<4xf32>
    %125 = vector.multi_reduction <maximumf>, %124, %cst_23 [1] : vector<4x128xf32> to vector<4xf32>
    %126 = vector.shape_cast %125 : vector<4xf32> to vector<4x1xf32>
    %127 = vector.broadcast %126 : vector<4x1xf32> to vector<4x128xf32>
    %128 = arith.subf %124, %127 : vector<4x128xf32>
    %129 = math.exp %128 : vector<4x128xf32>
    %cst_24 = arith.constant dense<0.000000e+00> : vector<4xf32>
    %130 = vector.multi_reduction <add>, %129, %cst_24 [1] : vector<4x128xf32> to vector<4xf32>
    %131 = vector.shape_cast %130 : vector<4xf32> to vector<4x1xf32>
    %132 = vector.broadcast %131 : vector<4x1xf32> to vector<4x128xf32>
    %133 = arith.divf %129, %132 : vector<4x128xf32>
    %c0_25 = arith.constant 0 : index
    %c0_26 = arith.constant 0 : index
    %134 = vector.load %arg7[%c0_25, %c0_26] : memref<4x128xf32, #tpu.memory_space<vmem>>, vector<4x128xf32>
    tpu.vector_store %arg7[%c0_25, %c0_26], %133 {strides = array<i32>} : memref<4x128xf32, #tpu.memory_space<vmem>>, vector<4x128xf32>,
    return
  }
}

</mosaic_0001>

<llo_original>
// kernel: tpu_custom_call.1
$region0: #{tpu_custom_call.1}
  #allocation0 [shape = 'u32[]', space=smem, size = 0x4, offset = 0x4, fixed_abs, tag = 'smem constant byte address 0x4 - core index']
  #allocation1 [shape = 'u32[144,128]{1,0:T(1,128)}', space=vmem, size = 0x12000, scoped, tag = 'internal scratch']
  %s0 = inlined_call_operand.vmem [shape: s32[4,8], index: 0, kind: input, shape index: {}]
  %s1 = inlined_call_operand.vmem [shape: s32[4,6], index: 1, kind: input, shape index: {}]
  %s2 = inlined_call_operand.vmem [shape: f32[128,64], index: 2, kind: input, shape index: {}]
  %s3 = inlined_call_operand.hbm [shape: f32[128,384], index: 3, kind: input, shape index: {}]
  %s4 = inlined_call_operand.vmem [shape: f32[2,384], index: 4, kind: input, shape index: {}]
  %s5 = inlined_call_operand.hbm [shape: f32[384,384], index: 5, kind: input, shape index: {}]
  %s6 = inlined_call_operand.hbm [shape: f32[384,128], index: 6, kind: input, shape index: {}]
  %s7 = inlined_call_operand.hbm [shape: f32[4,128], index: 7, kind: output, shape index: {}]
  %s8 = sld [smem:[#allocation0]]
  $region50: #{tpu_custom_call.1} parent=0
    _
  %s10 = ssub.s32 1, %s8
  %s11 = scalar_select 0, %s10, %s8
  $region1: #{tpu_custom_call.1} parent=0
    #allocation2 [shape = 'u8[196608]{0}', space=vmem, size = 0x30000, scoped, tag = 'input window, operand 3, single buffered']
    #allocation3 [shape = 's32[1]{0}', space=sflag, size = 0x4, scoped, tag = 'scoped memory for tpu_custom_call.1']
    #allocation4 [shape = 's32[1]{0}', space=sflag, size = 0x4, scoped, tag = 'scoped memory for tpu_custom_call.1']
    #allocation5 [shape = 'u8[589824]{0}', space=vmem, size = 0x90000, scoped, tag = 'input window, operand 5, single buffered']
    #allocation6 [shape = 's32[1]{0}', space=sflag, size = 0x4, scoped, tag = 'scoped memory for tpu_custom_call.1']
    #allocation7 [shape = 'u8[196608]{0}', space=vmem, size = 0x30000, scoped, tag = 'input window, operand 6, single buffered']
    #allocation8 [shape = 'u8[2048]{0}', space=vmem, size = 0x800, scoped, tag = 'output window, operand 0, single buffered']
    %12 = vsyncpa [#allocation3], 0
    %13 = vsyncpa [#allocation6], 0
    %14 = vsyncpa [#allocation4], 0
    // Predicated region
    $region2: #{tpu_custom_call.1} parent=1 // pred_check
      _
    $region3: #{tpu_custom_call.1} parent=1 // pred_check_branch
      %16 = sbr.rel (0) target = $region5
    $region4: #{tpu_custom_call.1} parent=1 // pred_region
      _
    $region5: #{tpu_custom_call.1} parent=1 // pred_fallthru
      _
    // Predicated region
    $region6: #{tpu_custom_call.1} parent=1 // pred_check
      _
    $region7: #{tpu_custom_call.1} parent=1 // pred_check_branch
      %18 = sbr.rel (0) target = $region9
    $region8: #{tpu_custom_call.1} parent=1 // pred_region
      _
    $region9: #{tpu_custom_call.1} parent=1 // pred_fallthru
      _
    // Predicated region
    $region10: #{tpu_custom_call.1} parent=1 // pred_check
      _
    $region11: #{tpu_custom_call.1} parent=1 // pred_check_branch
      %20 = sbr.rel (0) target = $region13
    $region12: #{tpu_custom_call.1} parent=1 // pred_region
      _
    $region13: #{tpu_custom_call.1} parent=1 // pred_fallthru
      _
    // Predicated region
    $region14: #{tpu_custom_call.1} parent=1 // pred_check
      _
    $region15: #{tpu_custom_call.1} parent=1 // pred_check_branch
      %22 = sbr.rel (0) target = $region17
    $region16: #{tpu_custom_call.1} parent=1 // pred_region
      %s24 = ssub.s32 6144, 6144
      %25 = vsyncadd [#allocation3], %s24
      %s26 = sshll.u32 [#allocation2], 4
      %s27 = int_to_ptr.vmem [resolvable:$true] %s26
      %32 = dma.hbm_to_vmem [thread:$0]  %s3, 6144, %s27, [#allocation3], 384, 384, 24
    $region17: #{tpu_custom_call.1} parent=1 // pred_fallthru
      _
    // Predicated region
    $region18: #{tpu_custom_call.1} parent=1 // pred_check
      _
    $region19: #{tpu_custom_call.1} parent=1 // pred_check_branch
      %34 = sbr.rel (0) target = $region21
    $region20: #{tpu_custom_call.1} parent=1 // pred_region
      _
    $region21: #{tpu_custom_call.1} parent=1 // pred_fallthru
      _
    // Predicated region
    $region22: #{tpu_custom_call.1} parent=1 // pred_check
      _
    $region23: #{tpu_custom_call.1} parent=1 // pred_check_branch
      %36 = sbr.rel (0) target = $region25
    $region24: #{tpu_custom_call.1} parent=1 // pred_region
      %s38 = ssub.s32 18432, 18432
      %39 = vsyncadd [#allocation6], %s38
      %s40 = sshll.u32 [#allocation5], 4
      %s41 = int_to_ptr.vmem [resolvable:$true] %s40
      %46 = dma.hbm_to_vmem [thread:$0]  %s5, 18432, %s41, [#allocation6], 384, 384, 24
    $region25: #{tpu_custom_call.1} parent=1 // pred_fallthru
      _
    // Predicated region
    $region26: #{tpu_custom_call.1} parent=1 // pred_check
      _
    $region27: #{tpu_custom_call.1} parent=1 // pred_check_branch
      %48 = sbr.rel (0) target = $region29
    $region28: #{tpu_custom_call.1} parent=1 // pred_region
      %s50 = ssub.s32 6144, 6144
      %51 = vsyncadd [#allocation6], %s50
      %s52 = sshll.u32 [#allocation7], 4
      %s53 = int_to_ptr.vmem [resolvable:$true] %s52
      %58 = dma.hbm_to_vmem [thread:$0]  %s6, 6144, %s53, [#allocation6], 128, 128, 8
    $region29: #{tpu_custom_call.1} parent=1 // pred_fallthru
      _
    // Predicated region
    $region30: #{tpu_custom_call.1} parent=1 // pred_check
      _
    $region31: #{tpu_custom_call.1} parent=1 // pred_check_branch
      %60 = sbr.rel (0) target = $region33
    $region32: #{tpu_custom_call.1} parent=1 // pred_region
      %61 = dma.done [#allocation3], 6144
    $region33: #{tpu_custom_call.1} parent=1 // pred_fallthru
      _
    // Predicated region
    $region34: #{tpu_custom_call.1} parent=1 // pred_check
      _
    $region35: #{tpu_custom_call.1} parent=1 // pred_check_branch
      %63 = sbr.rel (0) target = $region37
    $region36: #{tpu_custom_call.1} parent=1 // pred_region
      %64 = dma.done [#allocation6], 18432
    $region37: #{tpu_custom_call.1} parent=1 // pred_fallthru
      _
    // Predicated region
    $region38: #{tpu_custom_call.1} parent=1 // pred_check
      _
    $region39: #{tpu_custom_call.1} parent=1 // pred_check_branch
      %66 = sbr.rel (0) target = $region41
    $region40: #{tpu_custom_call.1} parent=1 // pred_region
      %67 = dma.done [#allocation6], 6144
    $region41: #{tpu_custom_call.1} parent=1 // pred_fallthru
      _
    %v68 = vlaneseq
    %v69 = vand.u32 %v68, 127
    %v70 = vld [vmem:[%s0] sm:$0xf]
    %71 = vset.pattern.permute.xlu0 0
    %72 = vperm.xlu0 %71, %v70
    %v73 = vpop.permute.xlu0 %72
    %vm74 = vcmp.eq.s32.totalorder %v73, %v69
    %v75 = vsel %vm74, 1, 0
    %v76 = vcvt.s32.f32 %v75
    %v77 = vadd.f32 %v76, 0.0
    %78 = vset.pattern.permute.xlu0 1
    %79 = vperm.xlu0 %78, %v70
    %v80 = vpop.permute.xlu0 %79
    %vm81 = vcmp.eq.s32.totalorder %v80, %v69
    %v82 = vsel %vm81, 1, 0
    %v83 = vcvt.s32.f32 %v82
    %v84 = vadd.f32 %v77, %v83
    %85 = vset.pattern.permute.xlu0 2
    %86 = vperm.xlu0 %85, %v70
    %v87 = vpop.permute.xlu0 %86
    %vm88 = vcmp.eq.s32.totalorder %v87, %v69
    %v89 = vsel %vm88, 1, 0
    %v90 = vcvt.s32.f32 %v89
    %v91 = vadd.f32 %v84, %v90
    %92 = vset.pattern.permute.xlu0 3
    %93 = vperm.xlu0 %92, %v70
    %v94 = vpop.permute.xlu0 %93
    %vm95 = vcmp.eq.s32.totalorder %v94, %v69
    %v96 = vsel %vm95, 1, 0
    %v97 = vcvt.s32.f32 %v96
    %v98 = vadd.f32 %v91, %v97
    %99 = vset.pattern.permute.xlu0 4
    %100 = vperm.xlu0 %99, %v70
    %v101 = vpop.permute.xlu0 %100
    %vm102 = vcmp.eq.s32.totalorder %v101, %v69
    %v103 = vsel %vm102, 1, 0
    %v104 = vcvt.s32.f32 %v103
    %v105 = vadd.f32 %v98, %v104
    %106 = vset.pattern.permute.xlu0 5
    %107 = vperm.xlu0 %106, %v70
    %v108 = vpop.permute.xlu0 %107
    %vm109 = vcmp.eq.s32.totalorder %v108, %v69
    %v110 = vsel %vm109, 1, 0
    %v111 = vcvt.s32.f32 %v110
    %v112 = vadd.f32 %v105, %v111
    %113 = vset.pattern.permute.xlu0 6
    %114 = vperm.xlu0 %113, %v70
    %v115 = vpop.permute.xlu0 %114
    %vm116 = vcmp.eq.s32.totalorder %v115, %v69
    %v117 = vsel %vm116, 1, 0
    %v118 = vcvt.s32.f32 %v117
    %v119 = vadd.f32 %v112, %v118
    %120 = vset.pattern.permute.xlu0 7
    %121 = vperm.xlu0 %120, %v70
    %v122 = vpop.permute.xlu0 %121
    %vm123 = vcmp.eq.s32.totalorder %v122, %v69
    %v124 = vsel %vm123, 1, 0
    %v125 = vcvt.s32.f32 %v124
    %v126 = vadd.f32 %v119, %v125
    %v127 = vld [vmem:[%s1] sm:$0xf]
    %128 = vset.pattern.permute.xlu0 0
    %129 = vperm.xlu0 %128, %v127
    %v130 = vpop.permute.xlu0 %129
    %vm131 = vcmp.eq.s32.totalorder %v130, %v69
    %v132 = vsel %vm131, 1, 0
    %v133 = vcvt.s32.f32 %v132
    %v134 = vadd.f32 %v133, 0.0
    %135 = vset.pattern.permute.xlu0 1
    %136 = vperm.xlu0 %135, %v127
    %v137 = vpop.permute.xlu0 %136
    %vm138 = vcmp.eq.s32.totalorder %v137, %v69
    %v139 = vsel %vm138, 1, 0
    %v140 = vcvt.s32.f32 %v139
    %v141 = vadd.f32 %v134, %v140
    %142 = vset.pattern.permute.xlu0 2
    %143 = vperm.xlu0 %142, %v127
    %v144 = vpop.permute.xlu0 %143
    %vm145 = vcmp.eq.s32.totalorder %v144, %v69
    %v146 = vsel %vm145, 1, 0
    %v147 = vcvt.s32.f32 %v146
    %v148 = vadd.f32 %v141, %v147
    %149 = vset.pattern.permute.xlu0 3
    %150 = vperm.xlu0 %149, %v127
    %v151 = vpop.permute.xlu0 %150
    %vm152 = vcmp.eq.s32.totalorder %v151, %v69
    %v153 = vsel %vm152, 1, 0
    %v154 = vcvt.s32.f32 %v153
    %v155 = vadd.f32 %v148, %v154
    %156 = vset.pattern.permute.xlu0 4
    %157 = vperm.xlu0 %156, %v127
    %v158 = vpop.permute.xlu0 %157
    %vm159 = vcmp.eq.s32.totalorder %v158, %v69
    %v160 = vsel %vm159, 1, 0
    %v161 = vcvt.s32.f32 %v160
    %v162 = vadd.f32 %v155, %v161
    %163 = vset.pattern.permute.xlu0 5
    %164 = vperm.xlu0 %163, %v127
    %v165 = vpop.permute.xlu0 %164
    %vm166 = vcmp.eq.s32.totalorder %v165, %v69
    %v167 = vsel %vm166, 1, 0
    %v168 = vcvt.s32.f32 %v167
    %v169 = vadd.f32 %v162, %v168
    %v171 = vrot.slane %v169, 4
    %vm173 = vcmask 1043456
    %v174 = vsel %vm173, %v126, %v171
    %v175 = vld [vmem:[%s2] sm:$0xff]
    %v176 = vld [vmem:[%s2 + $0x8] sm:$0xff]
    %v177 = vld [vmem:[%s2 + $0x10] sm:$0xff]
    %v178 = vld [vmem:[%s2 + $0x18] sm:$0xff]
    %v179 = vld [vmem:[%s2 + $0x20] sm:$0xff]
    %v180 = vld [vmem:[%s2 + $0x28] sm:$0xff]
    %v181 = vld [vmem:[%s2 + $0x30] sm:$0xff]
    %v182 = vld [vmem:[%s2 + $0x38] sm:$0xff]
    %v183 = vld [vmem:[%s2 + $0x40] sm:$0xff]
    %v184 = vld [vmem:[%s2 + $0x48] sm:$0xff]
    %v185 = vld [vmem:[%s2 + $0x50] sm:$0xff]
    %v186 = vld [vmem:[%s2 + $0x58] sm:$0xff]
    %v187 = vld [vmem:[%s2 + $0x60] sm:$0xff]
    %v188 = vld [vmem:[%s2 + $0x68] sm:$0xff]
    %v189 = vld [vmem:[%s2 + $0x70] sm:$0xff]
    %v190 = vld [vmem:[%s2 + $0x78] sm:$0xff]
    %191 = vmatprep.subr.mxu0 0.0
    %192 = vmatpush1.msra.mxu0 %v175
    %193 = vmatprep.subr.mxu0 0.0
    %194 = vmatpush1.msra.mxu0 %v176
    %195 = vmatprep.subr.mxu0 0.0
    %196 = vmatpush1.msra.mxu0 %v177
    %197 = vmatprep.subr.mxu0 0.0
    %198 = vmatpush1.msra.mxu0 %v178
    %199 = vmatprep.subr.mxu0 0.0
    %200 = vmatpush1.msra.mxu0 %v179
    %201 = vmatprep.subr.mxu0 0.0
    %202 = vmatpush1.msra.mxu0 %v180
    %203 = vmatprep.subr.mxu0 0.0
    %204 = vmatpush1.msra.mxu0 %v181
    %205 = vmatprep.subr.mxu0 0.0
    %206 = vmatpush1.msra.mxu0 %v182
    %207 = vmatprep.subr.mxu0 0.0
    %208 = vmatpush1.msra.mxu0 %v183
    %209 = vmatprep.subr.mxu0 0.0
    %210 = vmatpush1.msra.mxu0 %v184
    %211 = vmatprep.subr.mxu0 0.0
    %212 = vmatpush1.msra.mxu0 %v185
    %213 = vmatprep.subr.mxu0 0.0
    %214 = vmatpush1.msra.mxu0 %v186
    %215 = vmatprep.subr.mxu0 0.0
    %216 = vmatpush1.msra.mxu0 %v187
    %217 = vmatprep.subr.mxu0 0.0
    %218 = vmatpush1.msra.mxu0 %v188
    %219 = vmatprep.subr.mxu0 0.0
    %220 = vmatpush1.msra.mxu0 %v189
    %221 = vmatprep.subr.mxu0 0.0
    %222 = vmatpush1.msra.mxu0 %v190
    %223 = vmatprep.subr.mxu0 0.0
    %224 = vmatpush1.msra.mxu0 0.0
    %225 = vmatprep.subr.mxu0 0.0
    %226 = vmatpush1.msra.mxu0 0.0
    %227 = vmatprep.subr.mxu0 0.0
    %228 = vmatpush1.msra.mxu0 0.0
    %229 = vmatprep.subr.mxu0 0.0
    %230 = vmatpush1.msra.mxu0 0.0
    %231 = vmatprep.subr.mxu0 0.0
    %232 = vmatpush1.msra.mxu0 0.0
    %233 = vmatprep.subr.mxu0 0.0
    %234 = vmatpush1.msra.mxu0 0.0
    %235 = vmatprep.subr.mxu0 0.0
    %236 = vmatpush1.msra.mxu0 0.0
    %237 = vmatprep.subr.mxu0 0.0
    %238 = vmatpush1.msra.mxu0 0.0
    %239 = vmatprep.subr.mxu0 0.0
    %240 = vmatpush1.msra.mxu0 0.0
    %241 = vmatprep.subr.mxu0 0.0
    %242 = vmatpush1.msra.mxu0 0.0
    %243 = vmatprep.subr.mxu0 0.0
    %244 = vmatpush1.msra.mxu0 0.0
    %245 = vmatprep.subr.mxu0 0.0
    %246 = vmatpush1.msra.mxu0 0.0
    %247 = vmatprep.subr.mxu0 0.0
    %248 = vmatpush1.msra.mxu0 0.0
    %249 = vmatprep.subr.mxu0 0.0
    %250 = vmatpush1.msra.mxu0 0.0
    %251 = vmatprep.subr.mxu0 0.0
    %252 = vmatpush1.msra.mxu0 0.0
    %253 = vmatprep.subr.mxu0 0.0
    %254 = vmatpush1.msra.mxu0 0.0
    %255 = vmatprep.mubr.f32.mxu0 0.0
    %256 = vmatmul.mubr.f32.gmra.mrb[0].mxu0 %v174
    %v257 = vpop.f32.mrb[0].mxu0
    %v258 = vadd.f32 0.0, %v257
    %v259 = vpop.f32.mrb[0].mxu0
    %260 = vdwg.mxu0
    %v261 = vlaneseq
    %v262 = vshrl.u32 %v261, 7
    %vm263 = vcmp.lt.s32.totalorder %v262, 4
    %v264 = vsel %vm263, 0.125, 0.16666667
    %v265 = vmul.f32 %v258, %v264
    %v267 = vrot.slane %v265, 4
    %268 = vrot.lane.b32.xlu0 %v267, 64
    %v269 = vpop.permute.xlu0 %268
    %vm271 = vcmask 523264
    %v272 = vsel %vm271, %v265, %v269
    %v273 = vld [vmem:[%s4] sm:$0x3f]
    %v274 = vld [vmem:[#allocation2] sm:$0xff]
    %v275 = vld [vmem:[#allocation2 + $0x8] sm:$0xff]
    %v276 = vld [vmem:[#allocation2 + $0x10] sm:$0xff]
    %v277 = vld [vmem:[#allocation2 + $0x18] sm:$0xff]
    %v278 = vld [vmem:[#allocation2 + $0x20] sm:$0xff]
    %v279 = vld [vmem:[#allocation2 + $0x28] sm:$0xff]
    %v280 = vld [vmem:[#allocation2 + $0x30] sm:$0xff]
    %v281 = vld [vmem:[#allocation2 + $0x38] sm:$0xff]
    %v282 = vld [vmem:[#allocation2 + $0x40] sm:$0xff]
    %v283 = vld [vmem:[#allocation2 + $0x48] sm:$0xff]
    %v284 = vld [vmem:[#allocation2 + $0x50] sm:$0xff]
    %v285 = vld [vmem:[#allocation2 + $0x58] sm:$0xff]
    %v286 = vld [vmem:[#allocation2 + $0x60] sm:$0xff]
    %v287 = vld [vmem:[#allocation2 + $0x68] sm:$0xff]
    %v288 = vld [vmem:[#allocation2 + $0x70] sm:$0xff]
    %v289 = vld [vmem:[#allocation2 + $0x78] sm:$0xff]
    %v290 = vld [vmem:[#allocation2 + $0x80] sm:$0xff]
    %v291 = vld [vmem:[#allocation2 + $0x88] sm:$0xff]
    %v292 = vld [vmem:[#allocation2 + $0x90] sm:$0xff]
    %v293 = vld [vmem:[#allocation2 + $0x98] sm:$0xff]
    %v294 = vld [vmem:[#allocation2 + $0xa0] sm:$0xff]
    %v295 = vld [vmem:[#allocation2 + $0xa8] sm:$0xff]
    %v296 = vld [vmem:[#allocation2 + $0xb0] sm:$0xff]
    %v297 = vld [vmem:[#allocation2 + $0xb8] sm:$0xff]
    %v298 = vld [vmem:[#allocation2 + $0xc0] sm:$0xff]
    %v299 = vld [vmem:[#allocation2 + $0xc8] sm:$0xff]
    %v300 = vld [vmem:[#allocation2 + $0xd0] sm:$0xff]
    %v301 = vld [vmem:[#allocation2 + $0xd8] sm:$0xff]
    %v302 = vld [vmem:[#allocation2 + $0xe0] sm:$0xff]
    %v303 = vld [vmem:[#allocation2 + $0xe8] sm:$0xff]
    %v304 = vld [vmem:[#allocation2 + $0xf0] sm:$0xff]
    %v305 = vld [vmem:[#allocation2 + $0xf8] sm:$0xff]
    %v306 = vld [vmem:[#allocation2 + $0x100] sm:$0xff]
    %v307 = vld [vmem:[#allocation2 + $0x108] sm:$0xff]
    %v308 = vld [vmem:[#allocation2 + $0x110] sm:$0xff]
    %v309 = vld [vmem:[#allocation2 + $0x118] sm:$0xff]
    %v310 = vld [vmem:[#allocation2 + $0x120] sm:$0xff]
    %v311 = vld [vmem:[#allocation2 + $0x128] sm:$0xff]
    %v312 = vld [vmem:[#allocation2 + $0x130] sm:$0xff]
    %v313 = vld [vmem:[#allocation2 + $0x138] sm:$0xff]
    %v314 = vld [vmem:[#allocation2 + $0x140] sm:$0xff]
    %v315 = vld [vmem:[#allocation2 + $0x148] sm:$0xff]
    %v316 = vld [vmem:[#allocation2 + $0x150] sm:$0xff]
    %v317 = vld [vmem:[#allocation2 + $0x158] sm:$0xff]
    %v318 = vld [vmem:[#allocation2 + $0x160] sm:$0xff]
    %v319 = vld [vmem:[#allocation2 + $0x168] sm:$0xff]
    %v320 = vld [vmem:[#allocation2 + $0x170] sm:$0xff]
    %v321 = vld [vmem:[#allocation2 + $0x178] sm:$0xff]
    %v323 = vlaneseq
    %v324 = vshrl.u32 %v323, 7
    %v325 = vsub.s32 0, %v324
    %v326 = vrot.slane %v273, %v325
    %v327 = vlaneseq
    %v328 = vshrl.u32 %v327, 7
    %v329 = vsub.s32 2, %v328
    %v330 = vrot.slane %v273, %v329
    %v331 = vlaneseq
    %v332 = vshrl.u32 %v331, 7
    %v333 = vsub.s32 4, %v332
    %v334 = vrot.slane %v273, %v333
    %v338 = vlaneseq
    %v339 = vshrl.u32 %v338, 7
    %v340 = vsub.s32 0, %v339
    %v341 = vrot.slane %v326, %v340
    %v342 = vlaneseq
    %v343 = vshrl.u32 %v342, 7
    %v344 = vsub.s32 0, %v343
    %v345 = vrot.slane %v330, %v344
    %v346 = vlaneseq
    %v347 = vshrl.u32 %v346, 7
    %v348 = vsub.s32 0, %v347
    %v349 = vrot.slane %v334, %v348
    %350 = vmatprep.subr.mxu0 %v275
    %351 = vmatpush1.msra.mxu0 %v274
    %352 = vmatprep.subr.mxu0 %v278
    %353 = vmatpush1.msra.mxu0 %v277
    %354 = vmatprep.subr.mxu0 %v281
    %355 = vmatpush1.msra.mxu0 %v280
    %356 = vmatprep.subr.mxu0 %v284
    %357 = vmatpush1.msra.mxu0 %v283
    %358 = vmatprep.subr.mxu0 %v287
    %359 = vmatpush1.msra.mxu0 %v286
    %360 = vmatprep.subr.mxu0 %v290
    %361 = vmatpush1.msra.mxu0 %v289
    %362 = vmatprep.subr.mxu0 %v293
    %363 = vmatpush1.msra.mxu0 %v292
    %364 = vmatprep.subr.mxu0 %v296
    %365 = vmatpush1.msra.mxu0 %v295
    %366 = vmatprep.subr.mxu0 %v299
    %367 = vmatpush1.msra.mxu0 %v298
    %368 = vmatprep.subr.mxu0 %v302
    %369 = vmatpush1.msra.mxu0 %v301
    %370 = vmatprep.subr.mxu0 %v305
    %371 = vmatpush1.msra.mxu0 %v304
    %372 = vmatprep.subr.mxu0 %v308
    %373 = vmatpush1.msra.mxu0 %v307
    %374 = vmatprep.subr.mxu0 %v311
    %375 = vmatpush1.msra.mxu0 %v310
    %376 = vmatprep.subr.mxu0 %v314
    %377 = vmatpush1.msra.mxu0 %v313
    %378 = vmatprep.subr.mxu0 %v317
    %379 = vmatpush1.msra.mxu0 %v316
    %380 = vmatprep.subr.mxu0 %v320
    %381 = vmatpush1.msra.mxu0 %v319
    %382 = vmatprep.subr.mxu0 0.0
    %383 = vmatpush1.msra.mxu0 0.0
    %384 = vmatprep.subr.mxu0 0.0
    %385 = vmatpush1.msra.mxu0 0.0
    %386 = vmatprep.subr.mxu0 0.0
    %387 = vmatpush1.msra.mxu0 0.0
    %388 = vmatprep.subr.mxu0 0.0
    %389 = vmatpush1.msra.mxu0 0.0
    %390 = vmatprep.subr.mxu0 0.0
    %391 = vmatpush1.msra.mxu0 0.0
    %392 = vmatprep.subr.mxu0 0.0
    %393 = vmatpush1.msra.mxu0 0.0
    %394 = vmatprep.subr.mxu0 0.0
    %395 = vmatpush1.msra.mxu0 0.0
    %396 = vmatprep.subr.mxu0 0.0
    %397 = vmatpush1.msra.mxu0 0.0
    %398 = vmatprep.subr.mxu0 0.0
    %399 = vmatpush1.msra.mxu0 0.0
    %400 = vmatprep.subr.mxu0 0.0
    %401 = vmatpush1.msra.mxu0 0.0
    %402 = vmatprep.subr.mxu0 0.0
    %403 = vmatpush1.msra.mxu0 0.0
    %404 = vmatprep.subr.mxu0 0.0
    %405 = vmatpush1.msra.mxu0 0.0
    %406 = vmatprep.subr.mxu0 0.0
    %407 = vmatpush1.msra.mxu0 0.0
    %408 = vmatprep.subr.mxu0 0.0
    %409 = vmatpush1.msra.mxu0 0.0
    %410 = vmatprep.subr.mxu0 0.0
    %411 = vmatpush1.msra.mxu0 0.0
    %412 = vmatprep.subr.mxu0 0.0
    %413 = vmatpush1.msra.mxu0 0.0
    %414 = vmatprep.mubr.f32.mxu0 0.0
    %415 = vmatmul.mubr.f32.gmra.mrb[0].mxu0 %v272
    %v416 = vpop.f32.mrb[0].mxu0
    %v417 = vadd.f32 %v341, %v416
    %v418 = vpop.f32.mrb[0].mxu0
    %v419 = vadd.f32 %v345, %v418
    %420 = vdwg.mxu0
    %421 = vmatprep.subr.mxu0 0.0
    %422 = vmatpush1.msra.mxu0 %v276
    %423 = vmatprep.subr.mxu0 0.0
    %424 = vmatpush1.msra.mxu0 %v279
    %425 = vmatprep.subr.mxu0 0.0
    %426 = vmatpush1.msra.mxu0 %v282
    %427 = vmatprep.subr.mxu0 0.0
    %428 = vmatpush1.msra.mxu0 %v285
    %429 = vmatprep.subr.mxu0 0.0
    %430 = vmatpush1.msra.mxu0 %v288
    %431 = vmatprep.subr.mxu0 0.0
    %432 = vmatpush1.msra.mxu0 %v291
    %433 = vmatprep.subr.mxu0 0.0
    %434 = vmatpush1.msra.mxu0 %v294
    %435 = vmatprep.subr.mxu0 0.0
    %436 = vmatpush1.msra.mxu0 %v297
    %437 = vmatprep.subr.mxu0 0.0
    %438 = vmatpush1.msra.mxu0 %v300
    %439 = vmatprep.subr.mxu0 0.0
    %440 = vmatpush1.msra.mxu0 %v303
    %441 = vmatprep.subr.mxu0 0.0
    %442 = vmatpush1.msra.mxu0 %v306
    %443 = vmatprep.subr.mxu0 0.0
    %444 = vmatpush1.msra.mxu0 %v309
    %445 = vmatprep.subr.mxu0 0.0
    %446 = vmatpush1.msra.mxu0 %v312
    %447 = vmatprep.subr.mxu0 0.0
    %448 = vmatpush1.msra.mxu0 %v315
    %449 = vmatprep.subr.mxu0 0.0
    %450 = vmatpush1.msra.mxu0 %v318
    %451 = vmatprep.subr.mxu0 0.0
    %452 = vmatpush1.msra.mxu0 %v321
    %453 = vmatprep.subr.mxu0 0.0
    %454 = vmatpush1.msra.mxu0 0.0
    %455 = vmatprep.subr.mxu0 0.0
    %456 = vmatpush1.msra.mxu0 0.0
    %457 = vmatprep.subr.mxu0 0.0
    %458 = vmatpush1.msra.mxu0 0.0
    %459 = vmatprep.subr.mxu0 0.0
    %460 = vmatpush1.msra.mxu0 0.0
    %461 = vmatprep.subr.mxu0 0.0
    %462 = vmatpush1.msra.mxu0 0.0
    %463 = vmatprep.subr.mxu0 0.0
    %464 = vmatpush1.msra.mxu0 0.0
    %465 = vmatprep.subr.mxu0 0.0
    %466 = vmatpush1.msra.mxu0 0.0
    %467 = vmatprep.subr.mxu0 0.0
    %468 = vmatpush1.msra.mxu0 0.0
    %469 = vmatprep.subr.mxu0 0.0
    %470 = vmatpush1.msra.mxu0 0.0
    %471 = vmatprep.subr.mxu0 0.0
    %472 = vmatpush1.msra.mxu0 0.0
    %473 = vmatprep.subr.mxu0 0.0
    %474 = vmatpush1.msra.mxu0 0.0
    %475 = vmatprep.subr.mxu0 0.0
    %476 = vmatpush1.msra.mxu0 0.0
    %477 = vmatprep.subr.mxu0 0.0
    %478 = vmatpush1.msra.mxu0 0.0
    %479 = vmatprep.subr.mxu0 0.0
    %480 = vmatpush1.msra.mxu0 0.0
    %481 = vmatprep.subr.mxu0 0.0
    %482 = vmatpush1.msra.mxu0 0.0
    %483 = vmatprep.subr.mxu0 0.0
    %484 = vmatpush1.msra.mxu0 0.0
    %485 = vmatprep.mubr.f32.mxu0 0.0
    %486 = vmatmul.mubr.f32.gmra.mrb[0].mxu0 %v272
    %v487 = vpop.f32.mrb[0].mxu0
    %v488 = vadd.f32 %v349, %v487
    %v489 = vpop.f32.mrb[0].mxu0
    %490 = vdwg.mxu0
    %v491 = vmax.f32 %v417, 0.0
    %v492 = vmax.f32 %v419, 0.0
    %v493 = vmax.f32 %v488, 0.0
    %v494 = vld [vmem:[#allocation5] sm:$0xff]
    %v495 = vld [vmem:[#allocation5 + $0x8] sm:$0xff]
    %v496 = vld [vmem:[#allocation5 + $0x10] sm:$0xff]
    %v497 = vld [vmem:[#allocation5 + $0x18] sm:$0xff]
    %v498 = vld [vmem:[#allocation5 + $0x20] sm:$0xff]
    %v499 = vld [vmem:[#allocation5 + $0x28] sm:$0xff]
    %v500 = vld [vmem:[#allocation5 + $0x30] sm:$0xff]
    %v501 = vld [vmem:[#allocation5 + $0x38] sm:$0xff]
    %v502 = vld [vmem:[#allocation5 + $0x40] sm:$0xff]
    %v503 = vld [vmem:[#allocation5 + $0x48] sm:$0xff]
    %v504 = vld [vmem:[#allocation5 + $0x50] sm:$0xff]
    %v505 = vld [vmem:[#allocation5 + $0x58] sm:$0xff]
    %v506 = vld [vmem:[#allocation5 + $0x60] sm:$0xff]
    %v507 = vld [vmem:[#allocation5 + $0x68] sm:$0xff]
    %v508 = vld [vmem:[#allocation5 + $0x70] sm:$0xff]
    %v509 = vld [vmem:[#allocation5 + $0x78] sm:$0xff]
    %v510 = vld [vmem:[#allocation5 + $0x80] sm:$0xff]
    %v511 = vld [vmem:[#allocation5 + $0x88] sm:$0xff]
    %v512 = vld [vmem:[#allocation5 + $0x90] sm:$0xff]
    %v513 = vld [vmem:[#allocation5 + $0x98] sm:$0xff]
    %v514 = vld [vmem:[#allocation5 + $0xa0] sm:$0xff]
    %v515 = vld [vmem:[#allocation5 + $0xa8] sm:$0xff]
    %v516 = vld [vmem:[#allocation5 + $0xb0] sm:$0xff]
    %v517 = vld [vmem:[#allocation5 + $0xb8] sm:$0xff]
    %v518 = vld [vmem:[#allocation5 + $0xc0] sm:$0xff]
    %v519 = vld [vmem:[#allocation5 + $0xc8] sm:$0xff]
    %v520 = vld [vmem:[#allocation5 + $0xd0] sm:$0xff]
    %v521 = vld [vmem:[#allocation5 + $0xd8] sm:$0xff]
    %v522 = vld [vmem:[#allocation5 + $0xe0] sm:$0xff]
    %v523 = vld [vmem:[#allocation5 + $0xe8] sm:$0xff]
    %v524 = vld [vmem:[#allocation5 + $0xf0] sm:$0xff]
    %v525 = vld [vmem:[#allocation5 + $0xf8] sm:$0xff]
    %v526 = vld [vmem:[#allocation5 + $0x100] sm:$0xff]
    %v527 = vld [vmem:[#allocation5 + $0x108] sm:$0xff]
    %v528 = vld [vmem:[#allocation5 + $0x110] sm:$0xff]
    %v529 = vld [vmem:[#allocation5 + $0x118] sm:$0xff]
    %v530 = vld [vmem:[#allocation5 + $0x120] sm:$0xff]
    %v531 = vld [vmem:[#allocation5 + $0x128] sm:$0xff]
    %v532 = vld [vmem:[#allocation5 + $0x130] sm:$0xff]
    %v533 = vld [vmem:[#allocation5 + $0x138] sm:$0xff]
    %v534 = vld [vmem:[#allocation5 + $0x140] sm:$0xff]
    %v535 = vld [vmem:[#allocation5 + $0x148] sm:$0xff]
    %v536 = vld [vmem:[#allocation5 + $0x150] sm:$0xff]
    %v537 = vld [vmem:[#allocation5 + $0x158] sm:$0xff]
    %v538 = vld [vmem:[#allocation5 + $0x160] sm:$0xff]
    %v539 = vld [vmem:[#allocation5 + $0x168] sm:$0xff]
    %v540 = vld [vmem:[#allocation5 + $0x170] sm:$0xff]
    %v541 = vld [vmem:[#allocation5 + $0x178] sm:$0xff]
    %v542 = vld [vmem:[#allocation5 + $0x180] sm:$0xff]
    %v543 = vld [vmem:[#allocation5 + $0x188] sm:$0xff]
    %v544 = vld [vmem:[#allocation5 + $0x190] sm:$0xff]
    %v545 = vld [vmem:[#allocation5 + $0x198] sm:$0xff]
    %v546 = vld [vmem:[#allocation5 + $0x1a0] sm:$0xff]
    %v547 = vld [vmem:[#allocation5 + $0x1a8] sm:$0xff]
    %v548 = vld [vmem:[#allocation5 + $0x1b0] sm:$0xff]
    %v549 = vld [vmem:[#allocation5 + $0x1b8] sm:$0xff]
    %v550 = vld [vmem:[#allocation5 + $0x1c0] sm:$0xff]
    %v551 = vld [vmem:[#allocation5 + $0x1c8] sm:$0xff]
    %v552 = vld [vmem:[#allocation5 + $0x1d0] sm:$0xff]
    %v553 = vld [vmem:[#allocation5 + $0x1d8] sm:$0xff]
    %v554 = vld [vmem:[#allocation5 + $0x1e0] sm:$0xff]
    %v555 = vld [vmem:[#allocation5 + $0x1e8] sm:$0xff]
    %v556 = vld [vmem:[#allocation5 + $0x1f0] sm:$0xff]
    %v557 = vld [vmem:[#allocation5 + $0x1f8] sm:$0xff]
    %v558 = vld [vmem:[#allocation5 + $0x200] sm:$0xff]
    %v559 = vld [vmem:[#allocation5 + $0x208] sm:$0xff]
    %v560 = vld [vmem:[#allocation5 + $0x210] sm:$0xff]
    %v561 = vld [vmem:[#allocation5 + $0x218] sm:$0xff]
    %v562 = vld [vmem:[#allocation5 + $0x220] sm:$0xff]
    %v563 = vld [vmem:[#allocation5 + $0x228] sm:$0xff]
    %v564 = vld [vmem:[#allocation5 + $0x230] sm:$0xff]
    %v565 = vld [vmem:[#allocation5 + $0x238] sm:$0xff]
    %v566 = vld [vmem:[#allocation5 + $0x240] sm:$0xff]
    %v567 = vld [vmem:[#allocation5 + $0x248] sm:$0xff]
    %v568 = vld [vmem:[#allocation5 + $0x250] sm:$0xff]
    %v569 = vld [vmem:[#allocation5 + $0x258] sm:$0xff]
    %v570 = vld [vmem:[#allocation5 + $0x260] sm:$0xff]
    %v571 = vld [vmem:[#allocation5 + $0x268] sm:$0xff]
    %v572 = vld [vmem:[#allocation5 + $0x270] sm:$0xff]
    %v573 = vld [vmem:[#allocation5 + $0x278] sm:$0xff]
    %v574 = vld [vmem:[#allocation5 + $0x280] sm:$0xff]
    %v575 = vld [vmem:[#allocation5 + $0x288] sm:$0xff]
    %v576 = vld [vmem:[#allocation5 + $0x290] sm:$0xff]
    %v577 = vld [vmem:[#allocation5 + $0x298] sm:$0xff]
    %v578 = vld [vmem:[#allocation5 + $0x2a0] sm:$0xff]
    %v579 = vld [vmem:[#allocation5 + $0x2a8] sm:$0xff]
    %v580 = vld [vmem:[#allocation5 + $0x2b0] sm:$0xff]
    %v581 = vld [vmem:[#allocation5 + $0x2b8] sm:$0xff]
    %v582 = vld [vmem:[#allocation5 + $0x2c0] sm:$0xff]
    %v583 = vld [vmem:[#allocation5 + $0x2c8] sm:$0xff]
    %v584 = vld [vmem:[#allocation5 + $0x2d0] sm:$0xff]
    %v585 = vld [vmem:[#allocation5 + $0x2d8] sm:$0xff]
    %v586 = vld [vmem:[#allocation5 + $0x2e0] sm:$0xff]
    %v587 = vld [vmem:[#allocation5 + $0x2e8] sm:$0xff]
    %v588 = vld [vmem:[#allocation5 + $0x2f0] sm:$0xff]
    %v589 = vld [vmem:[#allocation5 + $0x2f8] sm:$0xff]
    %v590 = vld [vmem:[#allocation5 + $0x300] sm:$0xff]
    %v591 = vld [vmem:[#allocation5 + $0x308] sm:$0xff]
    %v592 = vld [vmem:[#allocation5 + $0x310] sm:$0xff]
    %v593 = vld [vmem:[#allocation5 + $0x318] sm:$0xff]
    %v594 = vld [vmem:[#allocation5 + $0x320] sm:$0xff]
    %v595 = vld [vmem:[#allocation5 + $0x328] sm:$0xff]
    %v596 = vld [vmem:[#allocation5 + $0x330] sm:$0xff]
    %v597 = vld [vmem:[#allocation5 + $0x338] sm:$0xff]
    %v598 = vld [vmem:[#allocation5 + $0x340] sm:$0xff]
    %v599 = vld [vmem:[#allocation5 + $0x348] sm:$0xff]
    %v600 = vld [vmem:[#allocation5 + $0x350] sm:$0xff]
    %v601 = vld [vmem:[#allocation5 + $0x358] sm:$0xff]
    %v602 = vld [vmem:[#allocation5 + $0x360] sm:$0xff]
    %v603 = vld [vmem:[#allocation5 + $0x368] sm:$0xff]
    %v604 = vld [vmem:[#allocation5 + $0x370] sm:$0xff]
    %v605 = vld [vmem:[#allocation5 + $0x378] sm:$0xff]
    %v606 = vld [vmem:[#allocation5 + $0x380] sm:$0xff]
    %v607 = vld [vmem:[#allocation5 + $0x388] sm:$0xff]
    %v608 = vld [vmem:[#allocation5 + $0x390] sm:$0xff]
    %v609 = vld [vmem:[#allocation5 + $0x398] sm:$0xff]
    %v610 = vld [vmem:[#allocation5 + $0x3a0] sm:$0xff]
    %v611 = vld [vmem:[#allocation5 + $0x3a8] sm:$0xff]
    %v612 = vld [vmem:[#allocation5 + $0x3b0] sm:$0xff]
    %v613 = vld [vmem:[#allocation5 + $0x3b8] sm:$0xff]
    %v614 = vld [vmem:[#allocation5 + $0x3c0] sm:$0xff]
    %v615 = vld [vmem:[#allocation5 + $0x3c8] sm:$0xff]
    %v616 = vld [vmem:[#allocation5 + $0x3d0] sm:$0xff]
    %v617 = vld [vmem:[#allocation5 + $0x3d8] sm:$0xff]
    %v618 = vld [vmem:[#allocation5 + $0x3e0] sm:$0xff]
    %v619 = vld [vmem:[#allocation5 + $0x3e8] sm:$0xff]
    %v620 = vld [vmem:[#allocation5 + $0x3f0] sm:$0xff]
    %v621 = vld [vmem:[#allocation5 + $0x3f8] sm:$0xff]
    %v622 = vld [vmem:[#allocation5 + $0x400] sm:$0xff]
    %v623 = vld [vmem:[#allocation5 + $0x408] sm:$0xff]
    %v624 = vld [vmem:[#allocation5 + $0x410] sm:$0xff]
    %v625 = vld [vmem:[#allocation5 + $0x418] sm:$0xff]
    %v626 = vld [vmem:[#allocation5 + $0x420] sm:$0xff]
    %v627 = vld [vmem:[#allocation5 + $0x428] sm:$0xff]
    %v628 = vld [vmem:[#allocation5 + $0x430] sm:$0xff]
    %v629 = vld [vmem:[#allocation5 + $0x438] sm:$0xff]
    %v630 = vld [vmem:[#allocation5 + $0x440] sm:$0xff]
    %v631 = vld [vmem:[#allocation5 + $0x448] sm:$0xff]
    %v632 = vld [vmem:[#allocation5 + $0x450] sm:$0xff]
    %v633 = vld [vmem:[#allocation5 + $0x458] sm:$0xff]
    %v634 = vld [vmem:[#allocation5 + $0x460] sm:$0xff]
    %v635 = vld [vmem:[#allocation5 + $0x468] sm:$0xff]
    %v636 = vld [vmem:[#allocation5 + $0x470] sm:$0xff]
    %v637 = vld [vmem:[#allocation5 + $0x478] sm:$0xff]
    %v638 = vlaneseq
    %v639 = vshrl.u32 %v638, 7
    %v640 = vsub.s32 1, %v639
    %v641 = vrot.slane %v273, %v640
    %v642 = vlaneseq
    %v643 = vshrl.u32 %v642, 7
    %v644 = vsub.s32 3, %v643
    %v645 = vrot.slane %v273, %v644
    %v646 = vlaneseq
    %v647 = vshrl.u32 %v646, 7
    %v648 = vsub.s32 5, %v647
    %v649 = vrot.slane %v273, %v648
    %v653 = vlaneseq
    %v654 = vshrl.u32 %v653, 7
    %v655 = vsub.s32 1, %v654
    %v656 = vrot.slane %v641, %v655
    %v657 = vlaneseq
    %v658 = vshrl.u32 %v657, 7
    %v659 = vsub.s32 1, %v658
    %v660 = vrot.slane %v645, %v659
    %v661 = vlaneseq
    %v662 = vshrl.u32 %v661, 7
    %v663 = vsub.s32 1, %v662
    %v664 = vrot.slane %v649, %v663
    %665 = vmatprep.subr.mxu0 %v495
    %666 = vmatpush1.msra.mxu0 %v494
    %667 = vmatprep.subr.mxu0 %v498
    %668 = vmatpush1.msra.mxu0 %v497
    %669 = vmatprep.subr.mxu0 %v501
    %670 = vmatpush1.msra.mxu0 %v500
    %671 = vmatprep.subr.mxu0 %v504
    %672 = vmatpush1.msra.mxu0 %v503
    %673 = vmatprep.subr.mxu0 %v507
    %674 = vmatpush1.msra.mxu0 %v506
    %675 = vmatprep.subr.mxu0 %v510
    %676 = vmatpush1.msra.mxu0 %v509
    %677 = vmatprep.subr.mxu0 %v513
    %678 = vmatpush1.msra.mxu0 %v512
    %679 = vmatprep.subr.mxu0 %v516
    %680 = vmatpush1.msra.mxu0 %v515
    %681 = vmatprep.subr.mxu0 %v519
    %682 = vmatpush1.msra.mxu0 %v518
    %683 = vmatprep.subr.mxu0 %v522
    %684 = vmatpush1.msra.mxu0 %v521
    %685 = vmatprep.subr.mxu0 %v525
    %686 = vmatpush1.msra.mxu0 %v524
    %687 = vmatprep.subr.mxu0 %v528
    %688 = vmatpush1.msra.mxu0 %v527
    %689 = vmatprep.subr.mxu0 %v531
    %690 = vmatpush1.msra.mxu0 %v530
    %691 = vmatprep.subr.mxu0 %v534
    %692 = vmatpush1.msra.mxu0 %v533
    %693 = vmatprep.subr.mxu0 %v537
    %694 = vmatpush1.msra.mxu0 %v536
    %695 = vmatprep.subr.mxu0 %v540
    %696 = vmatpush1.msra.mxu0 %v539
    %697 = vmatprep.subr.mxu0 %v543
    %698 = vmatpush1.msra.mxu0 %v542
    %699 = vmatprep.subr.mxu0 %v546
    %700 = vmatpush1.msra.mxu0 %v545
    %701 = vmatprep.subr.mxu0 %v549
    %702 = vmatpush1.msra.mxu0 %v548
    %703 = vmatprep.subr.mxu0 %v552
    %704 = vmatpush1.msra.mxu0 %v551
    %705 = vmatprep.subr.mxu0 %v555
    %706 = vmatpush1.msra.mxu0 %v554
    %707 = vmatprep.subr.mxu0 %v558
    %708 = vmatpush1.msra.mxu0 %v557
    %709 = vmatprep.subr.mxu0 %v561
    %710 = vmatpush1.msra.mxu0 %v560
    %711 = vmatprep.subr.mxu0 %v564
    %712 = vmatpush1.msra.mxu0 %v563
    %713 = vmatprep.subr.mxu0 %v567
    %714 = vmatpush1.msra.mxu0 %v566
    %715 = vmatprep.subr.mxu0 %v570
    %716 = vmatpush1.msra.mxu0 %v569
    %717 = vmatprep.subr.mxu0 %v573
    %718 = vmatpush1.msra.mxu0 %v572
    %719 = vmatprep.subr.mxu0 %v576
    %720 = vmatpush1.msra.mxu0 %v575
    %721 = vmatprep.subr.mxu0 %v579
    %722 = vmatpush1.msra.mxu0 %v578
    %723 = vmatprep.subr.mxu0 %v582
    %724 = vmatpush1.msra.mxu0 %v581
    %725 = vmatprep.subr.mxu0 %v585
    %726 = vmatpush1.msra.mxu0 %v584
    %727 = vmatprep.subr.mxu0 %v588
    %728 = vmatpush1.msra.mxu0 %v587
    %729 = vmatprep.mubr.f32.mxu0 %v492
    %730 = vmatmul.mubr.f32.gmra.mrb[0].mxu0 %v491
    %v731 = vpop.f32.mrb[0].mxu0
    %v732 = vadd.f32 %v656, %v731
    %v733 = vpop.f32.mrb[0].mxu0
    %v734 = vadd.f32 %v660, %v733
    %735 = vdwg.mxu0
    %736 = vmatprep.subr.mxu0 %v591
    %737 = vmatpush1.msra.mxu0 %v590
    %738 = vmatprep.subr.mxu0 %v594
    %739 = vmatpush1.msra.mxu0 %v593
    %740 = vmatprep.subr.mxu0 %v597
    %741 = vmatpush1.msra.mxu0 %v596
    %742 = vmatprep.subr.mxu0 %v600
    %743 = vmatpush1.msra.mxu0 %v599
    %744 = vmatprep.subr.mxu0 %v603
    %745 = vmatpush1.msra.mxu0 %v602
    %746 = vmatprep.subr.mxu0 %v606
    %747 = vmatpush1.msra.mxu0 %v605
    %748 = vmatprep.subr.mxu0 %v609
    %749 = vmatpush1.msra.mxu0 %v608
    %750 = vmatprep.subr.mxu0 %v612
    %751 = vmatpush1.msra.mxu0 %v611
    %752 = vmatprep.subr.mxu0 %v615
    %753 = vmatpush1.msra.mxu0 %v614
    %754 = vmatprep.subr.mxu0 %v618
    %755 = vmatpush1.msra.mxu0 %v617
    %756 = vmatprep.subr.mxu0 %v621
    %757 = vmatpush1.msra.mxu0 %v620
    %758 = vmatprep.subr.mxu0 %v624
    %759 = vmatpush1.msra.mxu0 %v623
    %760 = vmatprep.subr.mxu0 %v627
    %761 = vmatpush1.msra.mxu0 %v626
    %762 = vmatprep.subr.mxu0 %v630
    %763 = vmatpush1.msra.mxu0 %v629
    %764 = vmatprep.subr.mxu0 %v633
    %765 = vmatpush1.msra.mxu0 %v632
    %766 = vmatprep.subr.mxu0 %v636
    %767 = vmatpush1.msra.mxu0 %v635
    %768 = vmatprep.subr.mxu0 0.0
    %769 = vmatpush1.msra.mxu0 0.0
    %770 = vmatprep.subr.mxu0 0.0
    %771 = vmatpush1.msra.mxu0 0.0
    %772 = vmatprep.subr.mxu0 0.0
    %773 = vmatpush1.msra.mxu0 0.0
    %774 = vmatprep.subr.mxu0 0.0
    %775 = vmatpush1.msra.mxu0 0.0
    %776 = vmatprep.subr.mxu0 0.0
    %777 = vmatpush1.msra.mxu0 0.0
    %778 = vmatprep.subr.mxu0 0.0
    %779 = vmatpush1.msra.mxu0 0.0
    %780 = vmatprep.subr.mxu0 0.0
    %781 = vmatpush1.msra.mxu0 0.0
    %782 = vmatprep.subr.mxu0 0.0
    %783 = vmatpush1.msra.mxu0 0.0
    %784 = vmatprep.subr.mxu0 0.0
    %785 = vmatpush1.msra.mxu0 0.0
    %786 = vmatprep.subr.mxu0 0.0
    %787 = vmatpush1.msra.mxu0 0.0
    %788 = vmatprep.subr.mxu0 0.0
    %789 = vmatpush1.msra.mxu0 0.0
    %790 = vmatprep.subr.mxu0 0.0
    %791 = vmatpush1.msra.mxu0 0.0
    %792 = vmatprep.subr.mxu0 0.0
    %793 = vmatpush1.msra.mxu0 0.0
    %794 = vmatprep.subr.mxu0 0.0
    %795 = vmatpush1.msra.mxu0 0.0
    %796 = vmatprep.subr.mxu0 0.0
    %797 = vmatpush1.msra.mxu0 0.0
    %798 = vmatprep.subr.mxu0 0.0
    %799 = vmatpush1.msra.mxu0 0.0
    %800 = vmatprep.mubr.f32.mxu0 0.0
    %801 = vmatmul.mubr.f32.gmra.mrb[0].mxu0 %v493
    %v802 = vpop.f32.mrb[0].mxu0
    %v803 = vadd.f32 %v732, %v802
    %v804 = vpop.f32.mrb[0].mxu0
    %v805 = vadd.f32 %v734, %v804
    %806 = vdwg.mxu0
    %807 = vmatprep.subr.mxu0 0.0
    %808 = vmatpush1.msra.mxu0 %v496
    %809 = vmatprep.subr.mxu0 0.0
    %810 = vmatpush1.msra.mxu0 %v499
    %811 = vmatprep.subr.mxu0 0.0
    %812 = vmatpush1.msra.mxu0 %v502
    %813 = vmatprep.subr.mxu0 0.0
    %814 = vmatpush1.msra.mxu0 %v505
    %815 = vmatprep.subr.mxu0 0.0
    %816 = vmatpush1.msra.mxu0 %v508
    %817 = vmatprep.subr.mxu0 0.0
    %818 = vmatpush1.msra.mxu0 %v511
    %819 = vmatprep.subr.mxu0 0.0
    %820 = vmatpush1.msra.mxu0 %v514
    %821 = vmatprep.subr.mxu0 0.0
    %822 = vmatpush1.msra.mxu0 %v517
    %823 = vmatprep.subr.mxu0 0.0
    %824 = vmatpush1.msra.mxu0 %v520
    %825 = vmatprep.subr.mxu0 0.0
    %826 = vmatpush1.msra.mxu0 %v523
    %827 = vmatprep.subr.mxu0 0.0
    %828 = vmatpush1.msra.mxu0 %v526
    %829 = vmatprep.subr.mxu0 0.0
    %830 = vmatpush1.msra.mxu0 %v529
    %831 = vmatprep.subr.mxu0 0.0
    %832 = vmatpush1.msra.mxu0 %v532
    %833 = vmatprep.subr.mxu0 0.0
    %834 = vmatpush1.msra.mxu0 %v535
    %835 = vmatprep.subr.mxu0 0.0
    %836 = vmatpush1.msra.mxu0 %v538
    %837 = vmatprep.subr.mxu0 0.0
    %838 = vmatpush1.msra.mxu0 %v541
    %839 = vmatprep.subr.mxu0 0.0
    %840 = vmatpush1.msra.mxu0 %v544
    %841 = vmatprep.subr.mxu0 0.0
    %842 = vmatpush1.msra.mxu0 %v547
    %843 = vmatprep.subr.mxu0 0.0
    %844 = vmatpush1.msra.mxu0 %v550
    %845 = vmatprep.subr.mxu0 0.0
    %846 = vmatpush1.msra.mxu0 %v553
    %847 = vmatprep.subr.mxu0 0.0
    %848 = vmatpush1.msra.mxu0 %v556
    %849 = vmatprep.subr.mxu0 0.0
    %850 = vmatpush1.msra.mxu0 %v559
    %851 = vmatprep.subr.mxu0 0.0
    %852 = vmatpush1.msra.mxu0 %v562
    %853 = vmatprep.subr.mxu0 0.0
    %854 = vmatpush1.msra.mxu0 %v565
    %855 = vmatprep.subr.mxu0 0.0
    %856 = vmatpush1.msra.mxu0 %v568
    %857 = vmatprep.subr.mxu0 0.0
    %858 = vmatpush1.msra.mxu0 %v571
    %859 = vmatprep.subr.mxu0 0.0
    %860 = vmatpush1.msra.mxu0 %v574
    %861 = vmatprep.subr.mxu0 0.0
    %862 = vmatpush1.msra.mxu0 %v577
    %863 = vmatprep.subr.mxu0 0.0
    %864 = vmatpush1.msra.mxu0 %v580
    %865 = vmatprep.subr.mxu0 0.0
    %866 = vmatpush1.msra.mxu0 %v583
    %867 = vmatprep.subr.mxu0 0.0
    %868 = vmatpush1.msra.mxu0 %v586
    %869 = vmatprep.subr.mxu0 0.0
    %870 = vmatpush1.msra.mxu0 %v589
    %871 = vmatprep.mubr.f32.mxu0 %v492
    %872 = vmatmul.mubr.f32.gmra.mrb[0].mxu0 %v491
    %v873 = vpop.f32.mrb[0].mxu0
    %v874 = vadd.f32 %v664, %v873
    %v875 = vpop.f32.mrb[0].mxu0
    %876 = vdwg.mxu0
    %877 = vmatprep.subr.mxu0 0.0
    %878 = vmatpush1.msra.mxu0 %v592
    %879 = vmatprep.subr.mxu0 0.0
    %880 = vmatpush1.msra.mxu0 %v595
    %881 = vmatprep.subr.mxu0 0.0
    %882 = vmatpush1.msra.mxu0 %v598
    %883 = vmatprep.subr.mxu0 0.0
    %884 = vmatpush1.msra.mxu0 %v601
    %885 = vmatprep.subr.mxu0 0.0
    %886 = vmatpush1.msra.mxu0 %v604
    %887 = vmatprep.subr.mxu0 0.0
    %888 = vmatpush1.msra.mxu0 %v607
    %889 = vmatprep.subr.mxu0 0.0
    %890 = vmatpush1.msra.mxu0 %v610
    %891 = vmatprep.subr.mxu0 0.0
    %892 = vmatpush1.msra.mxu0 %v613
    %893 = vmatprep.subr.mxu0 0.0
    %894 = vmatpush1.msra.mxu0 %v616
    %895 = vmatprep.subr.mxu0 0.0
    %896 = vmatpush1.msra.mxu0 %v619
    %897 = vmatprep.subr.mxu0 0.0
    %898 = vmatpush1.msra.mxu0 %v622
    %899 = vmatprep.subr.mxu0 0.0
    %900 = vmatpush1.msra.mxu0 %v625
    %901 = vmatprep.subr.mxu0 0.0
    %902 = vmatpush1.msra.mxu0 %v628
    %903 = vmatprep.subr.mxu0 0.0
    %904 = vmatpush1.msra.mxu0 %v631
    %905 = vmatprep.subr.mxu0 0.0
    %906 = vmatpush1.msra.mxu0 %v634
    %907 = vmatprep.subr.mxu0 0.0
    %908 = vmatpush1.msra.mxu0 %v637
    %909 = vmatprep.subr.mxu0 0.0
    %910 = vmatpush1.msra.mxu0 0.0
    %911 = vmatprep.subr.mxu0 0.0
    %912 = vmatpush1.msra.mxu0 0.0
    %913 = vmatprep.subr.mxu0 0.0
    %914 = vmatpush1.msra.mxu0 0.0
    %915 = vmatprep.subr.mxu0 0.0
    %916 = vmatpush1.msra.mxu0 0.0
    %917 = vmatprep.subr.mxu0 0.0
    %918 = vmatpush1.msra.mxu0 0.0
    %919 = vmatprep.subr.mxu0 0.0
    %920 = vmatpush1.msra.mxu0 0.0
    %921 = vmatprep.subr.mxu0 0.0
    %922 = vmatpush1.msra.mxu0 0.0
    %923 = vmatprep.subr.mxu0 0.0
    %924 = vmatpush1.msra.mxu0 0.0
    %925 = vmatprep.subr.mxu0 0.0
    %926 = vmatpush1.msra.mxu0 0.0
    %927 = vmatprep.subr.mxu0 0.0
    %928 = vmatpush1.msra.mxu0 0.0
    %929 = vmatprep.subr.mxu0 0.0
    %930 = vmatpush1.msra.mxu0 0.0
    %931 = vmatprep.subr.mxu0 0.0
    %932 = vmatpush1.msra.mxu0 0.0
    %933 = vmatprep.subr.mxu0 0.0
    %934 = vmatpush1.msra.mxu0 0.0
    %935 = vmatprep.subr.mxu0 0.0
    %936 = vmatpush1.msra.mxu0 0.0
    %937 = vmatprep.subr.mxu0 0.0
    %938 = vmatpush1.msra.mxu0 0.0
    %939 = vmatprep.subr.mxu0 0.0
    %940 = vmatpush1.msra.mxu0 0.0
    %941 = vmatprep.mubr.f32.mxu0 0.0
    %942 = vmatmul.mubr.f32.gmra.mrb[0].mxu0 %v493
    %v943 = vpop.f32.mrb[0].mxu0
    %v944 = vadd.f32 %v874, %v943
    %v945 = vpop.f32.mrb[0].mxu0
    %946 = vdwg.mxu0
    %v947 = vmax.f32 %v803, 0.0
    %v948 = vmax.f32 %v805, 0.0
    %v949 = vmax.f32 %v944, 0.0
    %v950 = vld [vmem:[#allocation7] sm:$0xff]
    %v951 = vld [vmem:[#allocation7 + $0x8] sm:$0xff]
    %v952 = vld [vmem:[#allocation7 + $0x10] sm:$0xff]
    %v953 = vld [vmem:[#allocation7 + $0x18] sm:$0xff]
    %v954 = vld [vmem:[#allocation7 + $0x20] sm:$0xff]
    %v955 = vld [vmem:[#allocation7 + $0x28] sm:$0xff]
    %v956 = vld [vmem:[#allocation7 + $0x30] sm:$0xff]
    %v957 = vld [vmem:[#allocation7 + $0x38] sm:$0xff]
    %v958 = vld [vmem:[#allocation7 + $0x40] sm:$0xff]
    %v959 = vld [vmem:[#allocation7 + $0x48] sm:$0xff]
    %v960 = vld [vmem:[#allocation7 + $0x50] sm:$0xff]
    %v961 = vld [vmem:[#allocation7 + $0x58] sm:$0xff]
    %v962 = vld [vmem:[#allocation7 + $0x60] sm:$0xff]
    %v963 = vld [vmem:[#allocation7 + $0x68] sm:$0xff]
    %v964 = vld [vmem:[#allocation7 + $0x70] sm:$0xff]
    %v965 = vld [vmem:[#allocation7 + $0x78] sm:$0xff]
    %v966 = vld [vmem:[#allocation7 + $0x80] sm:$0xff]
    %v967 = vld [vmem:[#allocation7 + $0x88] sm:$0xff]
    %v968 = vld [vmem:[#allocation7 + $0x90] sm:$0xff]
    %v969 = vld [vmem:[#allocation7 + $0x98] sm:$0xff]
    %v970 = vld [vmem:[#allocation7 + $0xa0] sm:$0xff]
    %v971 = vld [vmem:[#allocation7 + $0xa8] sm:$0xff]
    %v972 = vld [vmem:[#allocation7 + $0xb0] sm:$0xff]
    %v973 = vld [vmem:[#allocation7 + $0xb8] sm:$0xff]
    %v974 = vld [vmem:[#allocation7 + $0xc0] sm:$0xff]
    %v975 = vld [vmem:[#allocation7 + $0xc8] sm:$0xff]
    %v976 = vld [vmem:[#allocation7 + $0xd0] sm:$0xff]
    %v977 = vld [vmem:[#allocation7 + $0xd8] sm:$0xff]
    %v978 = vld [vmem:[#allocation7 + $0xe0] sm:$0xff]
    %v979 = vld [vmem:[#allocation7 + $0xe8] sm:$0xff]
    %v980 = vld [vmem:[#allocation7 + $0xf0] sm:$0xff]
    %v981 = vld [vmem:[#allocation7 + $0xf8] sm:$0xff]
    %v982 = vld [vmem:[#allocation7 + $0x100] sm:$0xff]
    %v983 = vld [vmem:[#allocation7 + $0x108] sm:$0xff]
    %v984 = vld [vmem:[#allocation7 + $0x110] sm:$0xff]
    %v985 = vld [vmem:[#allocation7 + $0x118] sm:$0xff]
    %v986 = vld [vmem:[#allocation7 + $0x120] sm:$0xff]
    %v987 = vld [vmem:[#allocation7 + $0x128] sm:$0xff]
    %v988 = vld [vmem:[#allocation7 + $0x130] sm:$0xff]
    %v989 = vld [vmem:[#allocation7 + $0x138] sm:$0xff]
    %v990 = vld [vmem:[#allocation7 + $0x140] sm:$0xff]
    %v991 = vld [vmem:[#allocation7 + $0x148] sm:$0xff]
    %v992 = vld [vmem:[#allocation7 + $0x150] sm:$0xff]
    %v993 = vld [vmem:[#allocation7 + $0x158] sm:$0xff]
    %v994 = vld [vmem:[#allocation7 + $0x160] sm:$0xff]
    %v995 = vld [vmem:[#allocation7 + $0x168] sm:$0xff]
    %v996 = vld [vmem:[#allocation7 + $0x170] sm:$0xff]
    %v997 = vld [vmem:[#allocation7 + $0x178] sm:$0xff]
    %998 = vmatprep.subr.mxu0 0.0
    %999 = vmatpush1.msra.mxu0 %v950
    %1000 = vmatprep.subr.mxu0 0.0
    %1001 = vmatpush1.msra.mxu0 %v951
    %1002 = vmatprep.subr.mxu0 0.0
    %1003 = vmatpush1.msra.mxu0 %v952
    %1004 = vmatprep.subr.mxu0 0.0
    %1005 = vmatpush1.msra.mxu0 %v953
    %1006 = vmatprep.subr.mxu0 0.0
    %1007 = vmatpush1.msra.mxu0 %v954
    %1008 = vmatprep.subr.mxu0 0.0
    %1009 = vmatpush1.msra.mxu0 %v955
    %1010 = vmatprep.subr.mxu0 0.0
    %1011 = vmatpush1.msra.mxu0 %v956
    %1012 = vmatprep.subr.mxu0 0.0
    %1013 = vmatpush1.msra.mxu0 %v957
    %1014 = vmatprep.subr.mxu0 0.0
    %1015 = vmatpush1.msra.mxu0 %v958
    %1016 = vmatprep.subr.mxu0 0.0
    %1017 = vmatpush1.msra.mxu0 %v959
    %1018 = vmatprep.subr.mxu0 0.0
    %1019 = vmatpush1.msra.mxu0 %v960
    %1020 = vmatprep.subr.mxu0 0.0
    %1021 = vmatpush1.msra.mxu0 %v961
    %1022 = vmatprep.subr.mxu0 0.0
    %1023 = vmatpush1.msra.mxu0 %v962
    %1024 = vmatprep.subr.mxu0 0.0
    %1025 = vmatpush1.msra.mxu0 %v963
    %1026 = vmatprep.subr.mxu0 0.0
    %1027 = vmatpush1.msra.mxu0 %v964
    %1028 = vmatprep.subr.mxu0 0.0
    %1029 = vmatpush1.msra.mxu0 %v965
    %1030 = vmatprep.subr.mxu0 0.0
    %1031 = vmatpush1.msra.mxu0 %v966
    %1032 = vmatprep.subr.mxu0 0.0
    %1033 = vmatpush1.msra.mxu0 %v967
    %1034 = vmatprep.subr.mxu0 0.0
    %1035 = vmatpush1.msra.mxu0 %v968
    %1036 = vmatprep.subr.mxu0 0.0
    %1037 = vmatpush1.msra.mxu0 %v969
    %1038 = vmatprep.subr.mxu0 0.0
    %1039 = vmatpush1.msra.mxu0 %v970
    %1040 = vmatprep.subr.mxu0 0.0
    %1041 = vmatpush1.msra.mxu0 %v971
    %1042 = vmatprep.subr.mxu0 0.0
    %1043 = vmatpush1.msra.mxu0 %v972
    %1044 = vmatprep.subr.mxu0 0.0
    %1045 = vmatpush1.msra.mxu0 %v973
    %1046 = vmatprep.subr.mxu0 0.0
    %1047 = vmatpush1.msra.mxu0 %v974
    %1048 = vmatprep.subr.mxu0 0.0
    %1049 = vmatpush1.msra.mxu0 %v975
    %1050 = vmatprep.subr.mxu0 0.0
    %1051 = vmatpush1.msra.mxu0 %v976
    %1052 = vmatprep.subr.mxu0 0.0
    %1053 = vmatpush1.msra.mxu0 %v977
    %1054 = vmatprep.subr.mxu0 0.0
    %1055 = vmatpush1.msra.mxu0 %v978
    %1056 = vmatprep.subr.mxu0 0.0
    %1057 = vmatpush1.msra.mxu0 %v979
    %1058 = vmatprep.subr.mxu0 0.0
    %1059 = vmatpush1.msra.mxu0 %v980
    %1060 = vmatprep.subr.mxu0 0.0
    %1061 = vmatpush1.msra.mxu0 %v981
    %1062 = vmatprep.mubr.f32.mxu0 %v948
    %1063 = vmatmul.mubr.f32.gmra.mrb[0].mxu0 %v947
    %v1064 = vpop.f32.mrb[0].mxu0
    %v1065 = vadd.f32 0.0, %v1064
    %v1066 = vpop.f32.mrb[0].mxu0
    %1067 = vdwg.mxu0
    %1068 = vmatprep.subr.mxu0 0.0
    %1069 = vmatpush1.msra.mxu0 %v982
    %1070 = vmatprep.subr.mxu0 0.0
    %1071 = vmatpush1.msra.mxu0 %v983
    %1072 = vmatprep.subr.mxu0 0.0
    %1073 = vmatpush1.msra.mxu0 %v984
    %1074 = vmatprep.subr.mxu0 0.0
    %1075 = vmatpush1.msra.mxu0 %v985
    %1076 = vmatprep.subr.mxu0 0.0
    %1077 = vmatpush1.msra.mxu0 %v986
    %1078 = vmatprep.subr.mxu0 0.0
    %1079 = vmatpush1.msra.mxu0 %v987
    %1080 = vmatprep.subr.mxu0 0.0
    %1081 = vmatpush1.msra.mxu0 %v988
    %1082 = vmatprep.subr.mxu0 0.0
    %1083 = vmatpush1.msra.mxu0 %v989
    %1084 = vmatprep.subr.mxu0 0.0
    %1085 = vmatpush1.msra.mxu0 %v990
    %1086 = vmatprep.subr.mxu0 0.0
    %1087 = vmatpush1.msra.mxu0 %v991
    %1088 = vmatprep.subr.mxu0 0.0
    %1089 = vmatpush1.msra.mxu0 %v992
    %1090 = vmatprep.subr.mxu0 0.0
    %1091 = vmatpush1.msra.mxu0 %v993
    %1092 = vmatprep.subr.mxu0 0.0
    %1093 = vmatpush1.msra.mxu0 %v994
    %1094 = vmatprep.subr.mxu0 0.0
    %1095 = vmatpush1.msra.mxu0 %v995
    %1096 = vmatprep.subr.mxu0 0.0
    %1097 = vmatpush1.msra.mxu0 %v996
    %1098 = vmatprep.subr.mxu0 0.0
    %1099 = vmatpush1.msra.mxu0 %v997
    %1100 = vmatprep.subr.mxu0 0.0
    %1101 = vmatpush1.msra.mxu0 0.0
    %1102 = vmatprep.subr.mxu0 0.0
    %1103 = vmatpush1.msra.mxu0 0.0
    %1104 = vmatprep.subr.mxu0 0.0
    %1105 = vmatpush1.msra.mxu0 0.0
    %1106 = vmatprep.subr.mxu0 0.0
    %1107 = vmatpush1.msra.mxu0 0.0
    %1108 = vmatprep.subr.mxu0 0.0
    %1109 = vmatpush1.msra.mxu0 0.0
    %1110 = vmatprep.subr.mxu0 0.0
    %1111 = vmatpush1.msra.mxu0 0.0
    %1112 = vmatprep.subr.mxu0 0.0
    %1113 = vmatpush1.msra.mxu0 0.0
    %1114 = vmatprep.subr.mxu0 0.0
    %1115 = vmatpush1.msra.mxu0 0.0
    %1116 = vmatprep.subr.mxu0 0.0
    %1117 = vmatpush1.msra.mxu0 0.0
    %1118 = vmatprep.subr.mxu0 0.0
    %1119 = vmatpush1.msra.mxu0 0.0
    %1120 = vmatprep.subr.mxu0 0.0
    %1121 = vmatpush1.msra.mxu0 0.0
    %1122 = vmatprep.subr.mxu0 0.0
    %1123 = vmatpush1.msra.mxu0 0.0
    %1124 = vmatprep.subr.mxu0 0.0
    %1125 = vmatpush1.msra.mxu0 0.0
    %1126 = vmatprep.subr.mxu0 0.0
    %1127 = vmatpush1.msra.mxu0 0.0
    %1128 = vmatprep.subr.mxu0 0.0
    %1129 = vmatpush1.msra.mxu0 0.0
    %1130 = vmatprep.subr.mxu0 0.0
    %1131 = vmatpush1.msra.mxu0 0.0
    %1132 = vmatprep.mubr.f32.mxu0 0.0
    %1133 = vmatmul.mubr.f32.gmra.mrb[0].mxu0 %v949
    %v1134 = vpop.f32.mrb[0].mxu0
    %v1135 = vadd.f32 %v1065, %v1134
    %v1136 = vpop.f32.mrb[0].mxu0
    %1137 = vdwg.mxu0
    %vm1138 = vcmp.lt.s32.totalorder %v69, 3
    %v1139 = vsel %vm1138, %v1135, -1e+30
    %v1140 = vsel %vm173, %v1139, -inf
    %1141 = vmax.xlane.f32.xlu0 %v1140
    %v1142 = vpop.xlane.xlu0 %1141
    %v1143 = vsub.f32 %v1139, %v1142
    %v1144 = vmul.f32 %v1143, 1.442695
    %v1145 = vpow.pop %v1144
    %v1146 = vsel %vm173, %v1145, 0.0
    %1147 = vadd.xlane.f32.xlu0 %v1146
    %v1148 = vpop.xlane.xlu0 %1147
    %v1149 = vrcp.pop %v1148
    %v1150 = vmul.f32 %v1145, %v1149
    %1151 = vst [vmem:[#allocation8] sm:$0xf] %v1150
    // Predicated region
    $region42: #{tpu_custom_call.1} parent=1 // pred_check
      _
    $region43: #{tpu_custom_call.1} parent=1 // pred_check_branch
      %1153 = sbr.rel (0) target = $region45
    $region44: #{tpu_custom_call.1} parent=1 // pred_region
      %s1155 = ssub.s32 64, 64
      %1156 = vsyncadd [#allocation4], %s1155
      %s1158 = sshll.u32 [#allocation8], 4
      %s1159 = int_to_ptr.vmem [resolvable:$true] %s1158
      %1161 = dma.vmem_to_hbm [thread:$0]  %s1159, 64, %s7, [#allocation4]
    $region45: #{tpu_custom_call.1} parent=1 // pred_fallthru
      _
    // Predicated region
    $region46: #{tpu_custom_call.1} parent=1 // pred_check
      _
    $region47: #{tpu_custom_call.1} parent=1 // pred_check_branch
      %1163 = sbr.rel (0) target = $region49
    $region48: #{tpu_custom_call.1} parent=1 // pred_region
      %1164 = dma.done [#allocation4], 64
    $region49: #{tpu_custom_call.1} parent=1 // pred_fallthru
      _
    %1165 = vsyncpa [#allocation3], 1
    %1166 = vsyncpa [#allocation6], 1
    %1167 = vsyncpa [#allocation4], 1

</llo_original>
